<compile_context>
chip_gen: v5e
topology: v5e:2x2
jax: 0.10.0
libtpu: 0.0.40
codegen_flags: <defaults>
</compile_context>

<pallas_src>
import functools
import math

import jax
import jax.numpy as jnp
from jax.experimental import pallas as pl
from jax.experimental.pallas import tpu as pltpu

_WIDTH = 3  # the module only closes (fc_in = C*l*1) when the input width == 3


def _round_up(x, m):
    return ((x + m - 1) // m) * m


# ---------------------------------------------------------------------------
# Parameter init (PyTorch-like layouts / uniform fan-in bounds)
# ---------------------------------------------------------------------------
def init_cnn_params(key, channel_in, height, width, filter_size, nobias=False):
    def conv_init(k, cout, cin, kh, kw):
        k1, k2 = jax.random.split(k)
        bound = 1.0 / math.sqrt(cin * kh * kw)
        w = jax.random.uniform(k1, (cout, cin, kh, kw), jnp.float32, -bound, bound)
        b = jax.random.uniform(k2, (cout,), jnp.float32, -bound, bound)
        return w, b

    def lin_init(k, fin, fout, bias=True):
        k1, k2 = jax.random.split(k)
        bound = 1.0 / math.sqrt(fin)
        w = jax.random.uniform(k1, (fin, fout), jnp.float32, -bound, bound)
        b = (jax.random.uniform(k2, (1, fout), jnp.float32, -bound, bound)
             if bias else None)
        return w, b

    keys = jax.random.split(key, 8)
    c = channel_in
    l = height
    params = {}
    params["conv1"] = conv_init(keys[0], 3 * c, c, filter_size, 3)
    l = l - filter_size + 1
    params["conv2"] = conv_init(keys[1], 3 * c, 3 * c, filter_size, 3)
    l = l - filter_size + 1
    params["conv3"] = conv_init(keys[2], c, 3 * c, filter_size, 3)
    l = l - filter_size + 1
    fc_in = c * l * 1
    if not nobias:
        params["fc"] = [lin_init(keys[3], fc_in, 32),
                        lin_init(keys[4], 32, 16),
                        lin_init(keys[5], 16, 8),
                        lin_init(keys[6], 8, 1, bias=False)]
    else:
        params["fc"] = [lin_init(keys[3], fc_in, 32),
                        lin_init(keys[4], 32, 16),
                        lin_init(keys[5], 16, 1, bias=False)]
    return params


# ---------------------------------------------------------------------------
# Weight prep: fold width-convolution (+ zero padding) and the input scale
# into matmul-ready matrices (plain-JAX glue, runs once at trace time).
# ---------------------------------------------------------------------------
def _conv_tap_matrices(w, pad_w, w_in):
    """PyTorch conv weight (Cout, Cin, kh, kw) -> per-height-tap banded matrices
    of shape (kh, w_in*Cin, w_out*Cout). Row index = wi*Cin + cin, column index
    = wo*Cout + cout, so each tap is a plain matmul on (rows, W*C) activations."""
    cout, cin, kh, kw = w.shape
    w_out = w_in + 2 * pad_w - kw + 1
    mat = jnp.zeros((kh, w_in * cin, w_out * cout), jnp.float32)
    for wo in range(w_out):
        for dw in range(kw):
            wi = wo + dw - pad_w
            if 0 <= wi < w_in:
                blk = jnp.transpose(w[:, :, :, dw], (2, 1, 0))   # (kh, cin, cout)
                mat = mat.at[:, wi * cin:(wi + 1) * cin,
                             wo * cout:(wo + 1) * cout].set(blk)
    return mat, w_out


def prepare_fused_params(params, channel_in, height, filter_size):
    c, fh = channel_in, filter_size
    (w1, b1) = params["conv1"]
    (w2, b2) = params["conv2"]
    (w3, b3) = params["conv3"]

    w1t, wout1 = _conv_tap_matrices(w1, pad_w=1, w_in=_WIDTH)
    w2t, wout2 = _conv_tap_matrices(w2, pad_w=1, w_in=wout1)
    w3t, wout3 = _conv_tap_matrices(w3, pad_w=0, w_in=wout2)
    assert wout3 == 1, "module requires the width to collapse to 1 (input width == 3)"

    scale = 255.0 * 2.0 / math.pi
    w1t = w1t * scale                              # fold input scaling into conv1
    b1c = jnp.tile(b1[None, :], (1, wout1))
    b2c = jnp.tile(b2[None, :], (1, wout2))
    b3c = jnp.tile(b3[None, :], (1, wout3))

    h1 = height - fh + 1
    h2 = h1 - fh + 1
    h3 = h2 - fh + 1

    fc = params["fc"]
    wfc1, bfc1 = fc[0]
    f1 = wfc1.shape[1]
    assert wfc1.shape[0] == c * h3
    # torch fc1 rows are in NCHW-flatten order (c, h); permute to our (h, c) order
    wfc1r = wfc1.reshape(c, h3, f1).transpose(1, 0, 2)        # (h3, c, f1)

    fc_ws = [wfc1r] + [w for (w, _) in fc[1:]]
    fc_bs = [bfc1] + [b for (_, b) in fc[1:]]

    flat = [w1t, b1c, w2t, b2c, w3t, b3c]
    for w, b in zip(fc_ws, fc_bs):
        flat.append(w)
        if b is not None:
            flat.append(b)

    meta = dict(fh=fh, h0=height, h1=h1, h2=h2, h3=h3,
                k0=int(w1t.shape[1]), k1=int(w1t.shape[2]),
                k2=int(w2t.shape[2]), k3=int(w3t.shape[2]),
                fc_dims=[int(w.shape[-1]) for w in fc_ws],
                fc_has_bias=[b is not None for b in fc_bs])
    return flat, meta


# ---------------------------------------------------------------------------
# The single fused Pallas kernel: conv1..conv3 + FC head, one batch tile per
# grid step, height-major rows so everything is a 2-D matmul on static slices.
# ---------------------------------------------------------------------------
def _build_fused_call(meta, n_tiles, tb):
    fh = meta["fh"]
    h0, h1, h2, h3 = meta["h0"], meta["h1"], meta["h2"], meta["h3"]
    k0, k1, k2, k3 = meta["k0"], meta["k1"], meta["k2"], meta["k3"]
    fc_dims = meta["fc_dims"]
    fc_has_bias = meta["fc_has_bias"]
    n_fc = len(fc_dims)

    def kernel(*refs):
        it = iter(refs)
        x_ref = next(it)
        conv_w, conv_b = [], []
        for _ in range(3):
            conv_w.append(next(it))
            conv_b.append(next(it))
        fc_w, fc_b = [], []
        for hb in fc_has_bias:
            fc_w.append(next(it))
            fc_b.append(next(it) if hb else None)
        o_ref = next(it)

        # One conv layer = fh banded 2-D matmuls over all TB examples at once.
        # Rows are (h, b) height-major, so tap dh is a contiguous, 8-aligned
        # static slice of the previous activation; valid outputs are exactly
        # the leading h_out*tb rows.
        def conv_layer(a, h_out, w_ref, b_ref):
            rows = h_out * tb
            acc = jnp.dot(a[0:rows, :], w_ref[0],
                          preferred_element_type=jnp.float32)
            for dh in range(1, fh):
                acc = acc + jnp.dot(a[dh * tb:dh * tb + rows, :], w_ref[dh],
                                    preferred_element_type=jnp.float32)
            return jnp.maximum(acc + b_ref[...], 0.0)

        a = x_ref[...]                                   # (h0*tb, k0)
        a = conv_layer(a, h1, conv_w[0], conv_b[0])      # (h1*tb, k1)
        a = conv_layer(a, h2, conv_w[1], conv_b[1])      # (h2*tb, k2)
        a = conv_layer(a, h3, conv_w[2], conv_b[2])      # (h3*tb, k3)

        # FC head. fc1 contracts over (h, c) of the conv3 output; each height h
        # is the contiguous (tb, k3) row block h*tb:(h+1)*tb, and the weight
        # rows were pre-permuted to (h, c) order so this equals torch's NCHW
        # flatten followed by the Linear — computed for the whole tile at once.
        acc = jnp.dot(a[0:tb, :], fc_w[0][0], preferred_element_type=jnp.float32)
        for h in range(1, h3):
            acc = acc + jnp.dot(a[h * tb:(h + 1) * tb, :], fc_w[0][h],
                                preferred_element_type=jnp.float32)
        if fc_b[0] is not None:
            acc = acc + fc_b[0][...]
        z = jnp.maximum(acc, 0.0) if n_fc > 1 else acc
        for kk in range(1, n_fc):
            z = jnp.dot(z, fc_w[kk][...], preferred_element_type=jnp.float32)
            if fc_b[kk] is not None:
                z = z + fc_b[kk][...]
            if kk != n_fc - 1:
                z = jnp.maximum(z, 0.0)
        o_ref[...] = z.astype(o_ref.dtype)

    def whole(shape):
        nd = len(shape)
        return pl.BlockSpec(shape, lambda i, _nd=nd: (0,) * _nd)

    in_specs = [pl.BlockSpec((h0 * tb, k0), lambda i: (i, 0)),
                whole((fh, k0, k1)), whole((1, k1)),
                whole((fh, k1, k2)), whole((1, k2)),
                whole((fh, k2, k3)), whole((1, k3)),
                whole((h3, k3, fc_dims[0]))]
    if fc_has_bias[0]:
        in_specs.append(whole((1, fc_dims[0])))
    for kk in range(1, n_fc):
        in_specs.append(whole((fc_dims[kk - 1], fc_dims[kk])))
        if fc_has_bias[kk]:
            in_specs.append(whole((1, fc_dims[kk])))

    return pl.pallas_call(
        kernel,
        out_shape=jax.ShapeDtypeStruct((n_tiles * tb, 1), jnp.float32),
        grid_spec=pltpu.PrefetchScalarGridSpec(
            num_scalar_prefetch=0,
            grid=(n_tiles,),
            in_specs=in_specs,
            out_specs=pl.BlockSpec((tb, 1), lambda i: (i, 0))),
        compiler_params=pltpu.CompilerParams(
            dimension_semantics=("parallel",),
            vmem_limit_bytes=32 * 1024 * 1024),
    )


# ---------------------------------------------------------------------------
# Forward (one fused pallas_call) and a pure-JAX reference for validation.
# ---------------------------------------------------------------------------
@functools.partial(jax.jit, static_argnums=(2, 3, 4, 5))
def cnn_forward(params, x, channel_in, height, filter_size, block_b=None):
    flat, meta = prepare_fused_params(params, channel_in, height, filter_size)
    n, c, h, w = x.shape
    assert c == channel_in and h == height and w == _WIDTH

    tb = block_b if block_b is not None else min(_round_up(n, 8), 128)
    tb = max(8, _round_up(tb, 8))
    n_pad = _round_up(n, tb)
    n_tiles = n_pad // tb
    if n_pad != n:
        x = jnp.pad(x, ((0, n_pad - n), (0, 0), (0, 0), (0, 0)))

    # NCHW -> rows ordered (tile, h, b_in_tile), columns = w*C + c
    x_rows = jnp.transpose(x, (0, 2, 3, 1)).reshape(n_pad, h, w * c)
    x_rows = (x_rows.reshape(n_tiles, tb, h, w * c)
                    .transpose(0, 2, 1, 3)
                    .reshape(n_tiles * h * tb, w * c))

    fused = _build_fused_call(meta, n_tiles, tb)
    preds = fused(x_rows, *flat)          # (n_pad, 1)
    return preds[:n]


def cnn_reference(params, x):
    scale = 255.0 * 2.0 / math.pi
    out = x * scale

    def conv(o, w, b, pad_w):
        y = jax.lax.conv_general_dilated(
            o, w, window_strides=(1, 1),
            padding=((0, 0), (pad_w, pad_w)),
            dimension_numbers=("NCHW", "OIHW", "NCHW"))
        return jnp.maximum(y + b.reshape(1, -1, 1, 1), 0.0)

    w1, b1 = params["conv1"]; out = conv(out, w1, b1, 1)
    w2, b2 = params["conv2"]; out = conv(out, w2, b2, 1)
    w3, b3 = params["conv3"]; out = conv(out, w3, b3, 0)
    n, c, h, w = out.shape
    out = out.reshape(n, c * h * w)
    fc = params["fc"]
    for i, (wl, bl) in enumerate(fc):
        out = out @ wl
        if bl is not None:
            out = out + bl
        if i != len(fc) - 1:
            out = jnp.maximum(out, 0.0)
    return out


if __name__ == "__main__":
    # width must be 3 so the flattened conv3 output matches the fc input size
    batch, channel_in, height, width, filter_size = 4, 2, 16, 3, 3
    key = jax.random.PRNGKey(0)
    kp, kx = jax.random.split(key)
    params = init_cnn_params(kp, channel_in, height, width, filter_size, nobias=False)
    x = jax.random.uniform(kx, (batch, channel_in, height, width),
                           jnp.float32, 0.0, math.pi / 2)

    preds = cnn_forward(params, x, channel_in, height, filter_size, None)
    jax.block_until_ready(preds)
    assert preds.shape == (batch, 1) and preds.dtype == jnp.float32

    ref = cnn_reference(params, x)
    assert jnp.allclose(preds, ref, rtol=1e-2, atol=1e-2), (preds, ref)

    # Also exercise the multi-tile + batch-padding path (batch=11, tiles of 8).
    x2 = jax.random.uniform(jax.random.PRNGKey(1),
                            (11, channel_in, height, width),
                            jnp.float32, 0.0, math.pi / 2)
    preds2 = cnn_forward(params, x2, channel_in, height, filter_size, 8)
    jax.block_until_ready(preds2)
    ref2 = cnn_reference(params, x2)
    assert preds2.shape == (11, 1)
    assert jnp.allclose(preds2, ref2, rtol=1e-2, atol=1e-2), (preds2, ref2)

    print("KERNEL_OK")
</pallas_src>

<mosaic_0001>
module attributes {stable_mosaic.version = 11 : i64} {
  func.func @kernel(%arg0: i32, %arg1: memref<128x6xf32, #tpu.memory_space<vmem>>, %arg2: memref<3x6x18xf32, #tpu.memory_space<vmem>>, %arg3: memref<1x18xf32, #tpu.memory_space<vmem>>, %arg4: memref<3x18x18xf32, #tpu.memory_space<vmem>>, %arg5: memref<1x18xf32, #tpu.memory_space<vmem>>, %arg6: memref<3x18x2xf32, #tpu.memory_space<vmem>>, %arg7: memref<1x2xf32, #tpu.memory_space<vmem>>, %arg8: memref<10x2x32xf32, #tpu.memory_space<vmem>>, %arg9: memref<1x32xf32, #tpu.memory_space<vmem>>, %arg10: memref<32x16xf32, #tpu.memory_space<vmem>>, %arg11: memref<1x16xf32, #tpu.memory_space<vmem>>, %arg12: memref<16x8xf32, #tpu.memory_space<vmem>>, %arg13: memref<1x8xf32, #tpu.memory_space<vmem>>, %arg14: memref<8x1xf32, #tpu.memory_space<vmem>>, %arg15: memref<8x1xf32, #tpu.memory_space<vmem>>) attributes {dimension_semantics = [#tpu.dimension_semantics<parallel>], iteration_bounds = array<i64: 1>, scalar_prefetch = 0 : i64, scratch_operands = 0 : i64, tpu.core_type = #tpu.core_type<tc>, window_params = [{transform_indices = @transform_0, window_bounds = array<i64: 128, 6>}, {pipeline_mode = #tpu.pipeline_mode<synchronous>, transform_indices = @transform_1, window_bounds = array<i64: 3, 6, 18>}, {pipeline_mode = #tpu.pipeline_mode<synchronous>, transform_indices = @transform_2, window_bounds = array<i64: 1, 18>}, {pipeline_mode = #tpu.pipeline_mode<synchronous>, transform_indices = @transform_3, window_bounds = array<i64: 3, 18, 18>}, {pipeline_mode = #tpu.pipeline_mode<synchronous>, transform_indices = @transform_4, window_bounds = array<i64: 1, 18>}, {pipeline_mode = #tpu.pipeline_mode<synchronous>, transform_indices = @transform_5, window_bounds = array<i64: 3, 18, 2>}, {pipeline_mode = #tpu.pipeline_mode<synchronous>, transform_indices = @transform_6, window_bounds = array<i64: 1, 2>}, {pipeline_mode = #tpu.pipeline_mode<synchronous>, transform_indices = @transform_7, window_bounds = array<i64: 10, 2, 32>}, {pipeline_mode = #tpu.pipeline_mode<synchronous>, transform_indices = @transform_8, window_bounds = array<i64: 1, 32>}, {pipeline_mode = #tpu.pipeline_mode<synchronous>, transform_indices = @transform_9, window_bounds = array<i64: 32, 16>}, {pipeline_mode = #tpu.pipeline_mode<synchronous>, transform_indices = @transform_10, window_bounds = array<i64: 1, 16>}, {pipeline_mode = #tpu.pipeline_mode<synchronous>, transform_indices = @transform_11, window_bounds = array<i64: 16, 8>}, {pipeline_mode = #tpu.pipeline_mode<synchronous>, transform_indices = @transform_12, window_bounds = array<i64: 1, 8>}, {pipeline_mode = #tpu.pipeline_mode<synchronous>, transform_indices = @transform_13, window_bounds = array<i64: 8, 1>}, {transform_indices = @transform_14, window_bounds = array<i64: 8, 1>}]} {
    %c0 = arith.constant 0 : index
    %c0_0 = arith.constant 0 : index
    %0 = vector.load %arg1[%c0, %c0_0] : memref<128x6xf32, #tpu.memory_space<vmem>>, vector<128x6xf32>
    %1 = vector.extract_strided_slice %0 {offsets = [0, 0], sizes = [112, 6], strides = [1, 1]} : vector<128x6xf32> to vector<112x6xf32>
    %c0_1 = arith.constant 0 : index
    %c0_2 = arith.constant 0 : index
    %c0_3 = arith.constant 0 : index
    %2 = vector.load %arg2[%c0_1, %c0_2, %c0_3] : memref<3x6x18xf32, #tpu.memory_space<vmem>>, vector<1x6x18xf32>
    %3 = vector.shape_cast %2 : vector<1x6x18xf32> to vector<6x18xf32>
    %cst = arith.constant dense<0.000000e+00> : vector<112x18xf32>
    %4 = tpu.matmul %1, %3, %cst {dimension_numbers = #tpu.dot_dimension_numbers<[1], [0], [0], [1], [0, 0, 1, 1], [], []>} : vector<112x6xf32>, vector<6x18xf32>, vector<112x18xf32> -> vector<112x18xf32>
    %5 = vector.extract_strided_slice %0 {offsets = [8, 0], sizes = [112, 6], strides = [1, 1]} : vector<128x6xf32> to vector<112x6xf32>
    %c1 = arith.constant 1 : index
    %c0_4 = arith.constant 0 : index
    %c0_5 = arith.constant 0 : index
    %6 = vector.load %arg2[%c1, %c0_4, %c0_5] : memref<3x6x18xf32, #tpu.memory_space<vmem>>, vector<1x6x18xf32>
    %7 = vector.shape_cast %6 : vector<1x6x18xf32> to vector<6x18xf32>
    %cst_6 = arith.constant dense<0.000000e+00> : vector<112x18xf32>
    %8 = tpu.matmul %5, %7, %cst_6 {dimension_numbers = #tpu.dot_dimension_numbers<[1], [0], [0], [1], [0, 0, 1, 1], [], []>} : vector<112x6xf32>, vector<6x18xf32>, vector<112x18xf32> -> vector<112x18xf32>
    %9 = arith.addf %4, %8 : vector<112x18xf32>
    %10 = vector.extract_strided_slice %0 {offsets = [16, 0], sizes = [112, 6], strides = [1, 1]} : vector<128x6xf32> to vector<112x6xf32>
    %c2 = arith.constant 2 : index
    %c0_7 = arith.constant 0 : index
    %c0_8 = arith.constant 0 : index
    %11 = vector.load %arg2[%c2, %c0_7, %c0_8] : memref<3x6x18xf32, #tpu.memory_space<vmem>>, vector<1x6x18xf32>
    %12 = vector.shape_cast %11 : vector<1x6x18xf32> to vector<6x18xf32>
    %cst_9 = arith.constant dense<0.000000e+00> : vector<112x18xf32>
    %13 = tpu.matmul %10, %12, %cst_9 {dimension_numbers = #tpu.dot_dimension_numbers<[1], [0], [0], [1], [0, 0, 1, 1], [], []>} : vector<112x6xf32>, vector<6x18xf32>, vector<112x18xf32> -> vector<112x18xf32>
    %14 = arith.addf %9, %13 : vector<112x18xf32>
    %c0_10 = arith.constant 0 : index
    %c0_11 = arith.constant 0 : index
    %15 = vector.load %arg3[%c0_10, %c0_11] : memref<1x18xf32, #tpu.memory_space<vmem>>, vector<1x18xf32>
    %16 = vector.broadcast %15 : vector<1x18xf32> to vector<112x18xf32>
    %17 = arith.addf %14, %16 : vector<112x18xf32>
    %cst_12 = arith.constant 0.000000e+00 : f32
    %18 = vector.broadcast %cst_12 : f32 to vector<112x18xf32>
    %19 = arith.maximumf %17, %18 : vector<112x18xf32>
    %20 = vector.extract_strided_slice %19 {offsets = [0, 0], sizes = [96, 18], strides = [1, 1]} : vector<112x18xf32> to vector<96x18xf32>
    %c0_13 = arith.constant 0 : index
    %c0_14 = arith.constant 0 : index
    %c0_15 = arith.constant 0 : index
    %21 = vector.load %arg4[%c0_13, %c0_14, %c0_15] : memref<3x18x18xf32, #tpu.memory_space<vmem>>, vector<1x18x18xf32>
    %22 = vector.shape_cast %21 : vector<1x18x18xf32> to vector<18x18xf32>
    %cst_16 = arith.constant dense<0.000000e+00> : vector<96x18xf32>
    %23 = tpu.matmul %20, %22, %cst_16 {dimension_numbers = #tpu.dot_dimension_numbers<[1], [0], [0], [1], [0, 0, 1, 1], [], []>} : vector<96x18xf32>, vector<18x18xf32>, vector<96x18xf32> -> vector<96x18xf32>
    %24 = vector.extract_strided_slice %19 {offsets = [8, 0], sizes = [96, 18], strides = [1, 1]} : vector<112x18xf32> to vector<96x18xf32>
    %c1_17 = arith.constant 1 : index
    %c0_18 = arith.constant 0 : index
    %c0_19 = arith.constant 0 : index
    %25 = vector.load %arg4[%c1_17, %c0_18, %c0_19] : memref<3x18x18xf32, #tpu.memory_space<vmem>>, vector<1x18x18xf32>
    %26 = vector.shape_cast %25 : vector<1x18x18xf32> to vector<18x18xf32>
    %cst_20 = arith.constant dense<0.000000e+00> : vector<96x18xf32>
    %27 = tpu.matmul %24, %26, %cst_20 {dimension_numbers = #tpu.dot_dimension_numbers<[1], [0], [0], [1], [0, 0, 1, 1], [], []>} : vector<96x18xf32>, vector<18x18xf32>, vector<96x18xf32> -> vector<96x18xf32>
    %28 = arith.addf %23, %27 : vector<96x18xf32>
    %29 = vector.extract_strided_slice %19 {offsets = [16, 0], sizes = [96, 18], strides = [1, 1]} : vector<112x18xf32> to vector<96x18xf32>
    %c2_21 = arith.constant 2 : index
    %c0_22 = arith.constant 0 : index
    %c0_23 = arith.constant 0 : index
    %30 = vector.load %arg4[%c2_21, %c0_22, %c0_23] : memref<3x18x18xf32, #tpu.memory_space<vmem>>, vector<1x18x18xf32>
    %31 = vector.shape_cast %30 : vector<1x18x18xf32> to vector<18x18xf32>
    %cst_24 = arith.constant dense<0.000000e+00> : vector<96x18xf32>
    %32 = tpu.matmul %29, %31, %cst_24 {dimension_numbers = #tpu.dot_dimension_numbers<[1], [0], [0], [1], [0, 0, 1, 1], [], []>} : vector<96x18xf32>, vector<18x18xf32>, vector<96x18xf32> -> vector<96x18xf32>
    %33 = arith.addf %28, %32 : vector<96x18xf32>
    %c0_25 = arith.constant 0 : index
    %c0_26 = arith.constant 0 : index
    %34 = vector.load %arg5[%c0_25, %c0_26] : memref<1x18xf32, #tpu.memory_space<vmem>>, vector<1x18xf32>
    %35 = vector.broadcast %34 : vector<1x18xf32> to vector<96x18xf32>
    %36 = arith.addf %33, %35 : vector<96x18xf32>
    %cst_27 = arith.constant 0.000000e+00 : f32
    %37 = vector.broadcast %cst_27 : f32 to vector<96x18xf32>
    %38 = arith.maximumf %36, %37 : vector<96x18xf32>
    %39 = vector.extract_strided_slice %38 {offsets = [0, 0], sizes = [80, 18], strides = [1, 1]} : vector<96x18xf32> to vector<80x18xf32>
    %c0_28 = arith.constant 0 : index
    %c0_29 = arith.constant 0 : index
    %c0_30 = arith.constant 0 : index
    %40 = vector.load %arg6[%c0_28, %c0_29, %c0_30] : memref<3x18x2xf32, #tpu.memory_space<vmem>>, vector<1x18x2xf32>
    %41 = vector.shape_cast %40 : vector<1x18x2xf32> to vector<18x2xf32>
    %cst_31 = arith.constant dense<0.000000e+00> : vector<80x2xf32>
    %42 = tpu.matmul %39, %41, %cst_31 {dimension_numbers = #tpu.dot_dimension_numbers<[1], [0], [0], [1], [0, 0, 1, 1], [], []>} : vector<80x18xf32>, vector<18x2xf32>, vector<80x2xf32> -> vector<80x2xf32>
    %43 = vector.extract_strided_slice %38 {offsets = [8, 0], sizes = [80, 18], strides = [1, 1]} : vector<96x18xf32> to vector<80x18xf32>
    %c1_32 = arith.constant 1 : index
    %c0_33 = arith.constant 0 : index
    %c0_34 = arith.constant 0 : index
    %44 = vector.load %arg6[%c1_32, %c0_33, %c0_34] : memref<3x18x2xf32, #tpu.memory_space<vmem>>, vector<1x18x2xf32>
    %45 = vector.shape_cast %44 : vector<1x18x2xf32> to vector<18x2xf32>
    %cst_35 = arith.constant dense<0.000000e+00> : vector<80x2xf32>
    %46 = tpu.matmul %43, %45, %cst_35 {dimension_numbers = #tpu.dot_dimension_numbers<[1], [0], [0], [1], [0, 0, 1, 1], [], []>} : vector<80x18xf32>, vector<18x2xf32>, vector<80x2xf32> -> vector<80x2xf32>
    %47 = arith.addf %42, %46 : vector<80x2xf32>
    %48 = vector.extract_strided_slice %38 {offsets = [16, 0], sizes = [80, 18], strides = [1, 1]} : vector<96x18xf32> to vector<80x18xf32>
    %c2_36 = arith.constant 2 : index
    %c0_37 = arith.constant 0 : index
    %c0_38 = arith.constant 0 : index
    %49 = vector.load %arg6[%c2_36, %c0_37, %c0_38] : memref<3x18x2xf32, #tpu.memory_space<vmem>>, vector<1x18x2xf32>
    %50 = vector.shape_cast %49 : vector<1x18x2xf32> to vector<18x2xf32>
    %cst_39 = arith.constant dense<0.000000e+00> : vector<80x2xf32>
    %51 = tpu.matmul %48, %50, %cst_39 {dimension_numbers = #tpu.dot_dimension_numbers<[1], [0], [0], [1], [0, 0, 1, 1], [], []>} : vector<80x18xf32>, vector<18x2xf32>, vector<80x2xf32> -> vector<80x2xf32>
    %52 = arith.addf %47, %51 : vector<80x2xf32>
    %c0_40 = arith.constant 0 : index
    %c0_41 = arith.constant 0 : index
    %53 = vector.load %arg7[%c0_40, %c0_41] : memref<1x2xf32, #tpu.memory_space<vmem>>, vector<1x2xf32>
    %54 = vector.broadcast %53 : vector<1x2xf32> to vector<80x2xf32>
    %55 = arith.addf %52, %54 : vector<80x2xf32>
    %cst_42 = arith.constant 0.000000e+00 : f32
    %56 = vector.broadcast %cst_42 : f32 to vector<80x2xf32>
    %57 = arith.maximumf %55, %56 : vector<80x2xf32>
    %58 = vector.extract_strided_slice %57 {offsets = [0, 0], sizes = [8, 2], strides = [1, 1]} : vector<80x2xf32> to vector<8x2xf32>
    %c0_43 = arith.constant 0 : index
    %c0_44 = arith.constant 0 : index
    %c0_45 = arith.constant 0 : index
    %59 = vector.load %arg8[%c0_43, %c0_44, %c0_45] : memref<10x2x32xf32, #tpu.memory_space<vmem>>, vector<1x2x32xf32>
    %60 = vector.shape_cast %59 : vector<1x2x32xf32> to vector<2x32xf32>
    %cst_46 = arith.constant dense<0.000000e+00> : vector<8x32xf32>
    %61 = tpu.matmul %58, %60, %cst_46 {dimension_numbers = #tpu.dot_dimension_numbers<[1], [0], [0], [1], [0, 0, 1, 1], [], []>} : vector<8x2xf32>, vector<2x32xf32>, vector<8x32xf32> -> vector<8x32xf32>
    %62 = vector.extract_strided_slice %57 {offsets = [8, 0], sizes = [8, 2], strides = [1, 1]} : vector<80x2xf32> to vector<8x2xf32>
    %c1_47 = arith.constant 1 : index
    %c0_48 = arith.constant 0 : index
    %c0_49 = arith.constant 0 : index
    %63 = vector.load %arg8[%c1_47, %c0_48, %c0_49] : memref<10x2x32xf32, #tpu.memory_space<vmem>>, vector<1x2x32xf32>
    %64 = vector.shape_cast %63 : vector<1x2x32xf32> to vector<2x32xf32>
    %cst_50 = arith.constant dense<0.000000e+00> : vector<8x32xf32>
    %65 = tpu.matmul %62, %64, %cst_50 {dimension_numbers = #tpu.dot_dimension_numbers<[1], [0], [0], [1], [0, 0, 1, 1], [], []>} : vector<8x2xf32>, vector<2x32xf32>, vector<8x32xf32> -> vector<8x32xf32>
    %66 = arith.addf %61, %65 : vector<8x32xf32>
    %67 = vector.extract_strided_slice %57 {offsets = [16, 0], sizes = [8, 2], strides = [1, 1]} : vector<80x2xf32> to vector<8x2xf32>
    %c2_51 = arith.constant 2 : index
    %c0_52 = arith.constant 0 : index
    %c0_53 = arith.constant 0 : index
    %68 = vector.load %arg8[%c2_51, %c0_52, %c0_53] : memref<10x2x32xf32, #tpu.memory_space<vmem>>, vector<1x2x32xf32>
    %69 = vector.shape_cast %68 : vector<1x2x32xf32> to vector<2x32xf32>
    %cst_54 = arith.constant dense<0.000000e+00> : vector<8x32xf32>
    %70 = tpu.matmul %67, %69, %cst_54 {dimension_numbers = #tpu.dot_dimension_numbers<[1], [0], [0], [1], [0, 0, 1, 1], [], []>} : vector<8x2xf32>, vector<2x32xf32>, vector<8x32xf32> -> vector<8x32xf32>
    %71 = arith.addf %66, %70 : vector<8x32xf32>
    %72 = vector.extract_strided_slice %57 {offsets = [24, 0], sizes = [8, 2], strides = [1, 1]} : vector<80x2xf32> to vector<8x2xf32>
    %c3 = arith.constant 3 : index
    %c0_55 = arith.constant 0 : index
    %c0_56 = arith.constant 0 : index
    %73 = vector.load %arg8[%c3, %c0_55, %c0_56] : memref<10x2x32xf32, #tpu.memory_space<vmem>>, vector<1x2x32xf32>
    %74 = vector.shape_cast %73 : vector<1x2x32xf32> to vector<2x32xf32>
    %cst_57 = arith.constant dense<0.000000e+00> : vector<8x32xf32>
    %75 = tpu.matmul %72, %74, %cst_57 {dimension_numbers = #tpu.dot_dimension_numbers<[1], [0], [0], [1], [0, 0, 1, 1], [], []>} : vector<8x2xf32>, vector<2x32xf32>, vector<8x32xf32> -> vector<8x32xf32>
    %76 = arith.addf %71, %75 : vector<8x32xf32>
    %77 = vector.extract_strided_slice %57 {offsets = [32, 0], sizes = [8, 2], strides = [1, 1]} : vector<80x2xf32> to vector<8x2xf32>
    %c4 = arith.constant 4 : index
    %c0_58 = arith.constant 0 : index
    %c0_59 = arith.constant 0 : index
    %78 = vector.load %arg8[%c4, %c0_58, %c0_59] : memref<10x2x32xf32, #tpu.memory_space<vmem>>, vector<1x2x32xf32>
    %79 = vector.shape_cast %78 : vector<1x2x32xf32> to vector<2x32xf32>
    %cst_60 = arith.constant dense<0.000000e+00> : vector<8x32xf32>
    %80 = tpu.matmul %77, %79, %cst_60 {dimension_numbers = #tpu.dot_dimension_numbers<[1], [0], [0], [1], [0, 0, 1, 1], [], []>} : vector<8x2xf32>, vector<2x32xf32>, vector<8x32xf32> -> vector<8x32xf32>
    %81 = arith.addf %76, %80 : vector<8x32xf32>
    %82 = vector.extract_strided_slice %57 {offsets = [40, 0], sizes = [8, 2], strides = [1, 1]} : vector<80x2xf32> to vector<8x2xf32>
    %c5 = arith.constant 5 : index
    %c0_61 = arith.constant 0 : index
    %c0_62 = arith.constant 0 : index
    %83 = vector.load %arg8[%c5, %c0_61, %c0_62] : memref<10x2x32xf32, #tpu.memory_space<vmem>>, vector<1x2x32xf32>
    %84 = vector.shape_cast %83 : vector<1x2x32xf32> to vector<2x32xf32>
    %cst_63 = arith.constant dense<0.000000e+00> : vector<8x32xf32>
    %85 = tpu.matmul %82, %84, %cst_63 {dimension_numbers = #tpu.dot_dimension_numbers<[1], [0], [0], [1], [0, 0, 1, 1], [], []>} : vector<8x2xf32>, vector<2x32xf32>, vector<8x32xf32> -> vector<8x32xf32>
    %86 = arith.addf %81, %85 : vector<8x32xf32>
    %87 = vector.extract_strided_slice %57 {offsets = [48, 0], sizes = [8, 2], strides = [1, 1]} : vector<80x2xf32> to vector<8x2xf32>
    %c6 = arith.constant 6 : index
    %c0_64 = arith.constant 0 : index
    %c0_65 = arith.constant 0 : index
    %88 = vector.load %arg8[%c6, %c0_64, %c0_65] : memref<10x2x32xf32, #tpu.memory_space<vmem>>, vector<1x2x32xf32>
    %89 = vector.shape_cast %88 : vector<1x2x32xf32> to vector<2x32xf32>
    %cst_66 = arith.constant dense<0.000000e+00> : vector<8x32xf32>
    %90 = tpu.matmul %87, %89, %cst_66 {dimension_numbers = #tpu.dot_dimension_numbers<[1], [0], [0], [1], [0, 0, 1, 1], [], []>} : vector<8x2xf32>, vector<2x32xf32>, vector<8x32xf32> -> vector<8x32xf32>
    %91 = arith.addf %86, %90 : vector<8x32xf32>
    %92 = vector.extract_strided_slice %57 {offsets = [56, 0], sizes = [8, 2], strides = [1, 1]} : vector<80x2xf32> to vector<8x2xf32>
    %c7 = arith.constant 7 : index
    %c0_67 = arith.constant 0 : index
    %c0_68 = arith.constant 0 : index
    %93 = vector.load %arg8[%c7, %c0_67, %c0_68] : memref<10x2x32xf32, #tpu.memory_space<vmem>>, vector<1x2x32xf32>
    %94 = vector.shape_cast %93 : vector<1x2x32xf32> to vector<2x32xf32>
    %cst_69 = arith.constant dense<0.000000e+00> : vector<8x32xf32>
    %95 = tpu.matmul %92, %94, %cst_69 {dimension_numbers = #tpu.dot_dimension_numbers<[1], [0], [0], [1], [0, 0, 1, 1], [], []>} : vector<8x2xf32>, vector<2x32xf32>, vector<8x32xf32> -> vector<8x32xf32>
    %96 = arith.addf %91, %95 : vector<8x32xf32>
    %97 = vector.extract_strided_slice %57 {offsets = [64, 0], sizes = [8, 2], strides = [1, 1]} : vector<80x2xf32> to vector<8x2xf32>
    %c8 = arith.constant 8 : index
    %c0_70 = arith.constant 0 : index
    %c0_71 = arith.constant 0 : index
    %98 = vector.load %arg8[%c8, %c0_70, %c0_71] : memref<10x2x32xf32, #tpu.memory_space<vmem>>, vector<1x2x32xf32>
    %99 = vector.shape_cast %98 : vector<1x2x32xf32> to vector<2x32xf32>
    %cst_72 = arith.constant dense<0.000000e+00> : vector<8x32xf32>
    %100 = tpu.matmul %97, %99, %cst_72 {dimension_numbers = #tpu.dot_dimension_numbers<[1], [0], [0], [1], [0, 0, 1, 1], [], []>} : vector<8x2xf32>, vector<2x32xf32>, vector<8x32xf32> -> vector<8x32xf32>
    %101 = arith.addf %96, %100 : vector<8x32xf32>
    %102 = vector.extract_strided_slice %57 {offsets = [72, 0], sizes = [8, 2], strides = [1, 1]} : vector<80x2xf32> to vector<8x2xf32>
    %c9 = arith.constant 9 : index
    %c0_73 = arith.constant 0 : index
    %c0_74 = arith.constant 0 : index
    %103 = vector.load %arg8[%c9, %c0_73, %c0_74] : memref<10x2x32xf32, #tpu.memory_space<vmem>>, vector<1x2x32xf32>
    %104 = vector.shape_cast %103 : vector<1x2x32xf32> to vector<2x32xf32>
    %cst_75 = arith.constant dense<0.000000e+00> : vector<8x32xf32>
    %105 = tpu.matmul %102, %104, %cst_75 {dimension_numbers = #tpu.dot_dimension_numbers<[1], [0], [0], [1], [0, 0, 1, 1], [], []>} : vector<8x2xf32>, vector<2x32xf32>, vector<8x32xf32> -> vector<8x32xf32>
    %106 = arith.addf %101, %105 : vector<8x32xf32>
    %c0_76 = arith.constant 0 : index
    %c0_77 = arith.constant 0 : index
    %107 = vector.load %arg9[%c0_76, %c0_77] : memref<1x32xf32, #tpu.memory_space<vmem>>, vector<1x32xf32>
    %108 = vector.broadcast %107 : vector<1x32xf32> to vector<8x32xf32>
    %109 = arith.addf %106, %108 : vector<8x32xf32>
    %cst_78 = arith.constant 0.000000e+00 : f32
    %110 = vector.broadcast %cst_78 : f32 to vector<8x32xf32>
    %111 = arith.maximumf %109, %110 : vector<8x32xf32>
    %c0_79 = arith.constant 0 : index
    %c0_80 = arith.constant 0 : index
    %112 = vector.load %arg10[%c0_79, %c0_80] : memref<32x16xf32, #tpu.memory_space<vmem>>, vector<32x16xf32>
    %cst_81 = arith.constant dense<0.000000e+00> : vector<8x16xf32>
    %113 = tpu.matmul %111, %112, %cst_81 {dimension_numbers = #tpu.dot_dimension_numbers<[1], [0], [0], [1], [0, 0, 1, 1], [], []>} : vector<8x32xf32>, vector<32x16xf32>, vector<8x16xf32> -> vector<8x16xf32>
    %c0_82 = arith.constant 0 : index
    %c0_83 = arith.constant 0 : index
    %114 = vector.load %arg11[%c0_82, %c0_83] : memref<1x16xf32, #tpu.memory_space<vmem>>, vector<1x16xf32>
    %115 = vector.broadcast %114 : vector<1x16xf32> to vector<8x16xf32>
    %116 = arith.addf %113, %115 : vector<8x16xf32>
    %cst_84 = arith.constant 0.000000e+00 : f32
    %117 = vector.broadcast %cst_84 : f32 to vector<8x16xf32>
    %118 = arith.maximumf %116, %117 : vector<8x16xf32>
    %c0_85 = arith.constant 0 : index
    %c0_86 = arith.constant 0 : index
    %119 = vector.load %arg12[%c0_85, %c0_86] : memref<16x8xf32, #tpu.memory_space<vmem>>, vector<16x8xf32>
    %cst_87 = arith.constant dense<0.000000e+00> : vector<8x8xf32>
    %120 = tpu.matmul %118, %119, %cst_87 {dimension_numbers = #tpu.dot_dimension_numbers<[1], [0], [0], [1], [0, 0, 1, 1], [], []>} : vector<8x16xf32>, vector<16x8xf32>, vector<8x8xf32> -> vector<8x8xf32>
    %c0_88 = arith.constant 0 : index
    %c0_89 = arith.constant 0 : index
    %121 = vector.load %arg13[%c0_88, %c0_89] : memref<1x8xf32, #tpu.memory_space<vmem>>, vector<1x8xf32>
    %122 = vector.broadcast %121 : vector<1x8xf32> to vector<8x8xf32>
    %123 = arith.addf %120, %122 : vector<8x8xf32>
    %cst_90 = arith.constant 0.000000e+00 : f32
    %124 = vector.broadcast %cst_90 : f32 to vector<8x8xf32>
    %125 = arith.maximumf %123, %124 : vector<8x8xf32>
    %c0_91 = arith.constant 0 : index
    %c0_92 = arith.constant 0 : index
    %126 = vector.load %arg14[%c0_91, %c0_92] : memref<8x1xf32, #tpu.memory_space<vmem>>, vector<8x1xf32>
    %cst_93 = arith.constant dense<0.000000e+00> : vector<8x1xf32>
    %127 = tpu.matmul %125, %126, %cst_93 {dimension_numbers = #tpu.dot_dimension_numbers<[1], [0], [0], [1], [0, 0, 1, 1], [], []>} : vector<8x8xf32>, vector<8x1xf32>, vector<8x1xf32> -> vector<8x1xf32>
    %c0_94 = arith.constant 0 : index
    %c0_95 = arith.constant 0 : index
    %128 = vector.load %arg15[%c0_94, %c0_95] : memref<8x1xf32, #tpu.memory_space<vmem>>, vector<8x1xf32>
    tpu.vector_store %arg15[%c0_94, %c0_95], %127 {strides = array<i32>} : memref<8x1xf32, #tpu.memory_space<vmem>>, vector<8x1xf32>,
    return
  }
  func.func @transform_0(%arg0: i32) -> (i32, i32) {
    %c0_i32 = arith.constant 0 : i32
    %c0_i32_0 = arith.constant 0 : i32
    return %arg0, %c0_i32 : i32, i32
  }
  func.func @transform_1(%arg0: i32) -> (i32, i32, i32) {
    %c0_i32 = arith.constant 0 : i32
    %c0_i32_0 = arith.constant 0 : i32
    %c0_i32_1 = arith.constant 0 : i32
    %c0_i32_2 = arith.constant 0 : i32
    return %c0_i32, %c0_i32_0, %c0_i32_1 : i32, i32, i32
  }
  func.func @transform_2(%arg0: i32) -> (i32, i32) {
    %c0_i32 = arith.constant 0 : i32
    %c0_i32_0 = arith.constant 0 : i32
    %c0_i32_1 = arith.constant 0 : i32
    return %c0_i32, %c0_i32_0 : i32, i32
  }
  func.func @transform_3(%arg0: i32) -> (i32, i32, i32) {
    %c0_i32 = arith.constant 0 : i32
    %c0_i32_0 = arith.constant 0 : i32
    %c0_i32_1 = arith.constant 0 : i32
    %c0_i32_2 = arith.constant 0 : i32
    return %c0_i32, %c0_i32_0, %c0_i32_1 : i32, i32, i32
  }
  func.func @transform_4(%arg0: i32) -> (i32, i32) {
    %c0_i32 = arith.constant 0 : i32
    %c0_i32_0 = arith.constant 0 : i32
    %c0_i32_1 = arith.constant 0 : i32
    return %c0_i32, %c0_i32_0 : i32, i32
  }
  func.func @transform_5(%arg0: i32) -> (i32, i32, i32) {
    %c0_i32 = arith.constant 0 : i32
    %c0_i32_0 = arith.constant 0 : i32
    %c0_i32_1 = arith.constant 0 : i32
    %c0_i32_2 = arith.constant 0 : i32
    return %c0_i32, %c0_i32_0, %c0_i32_1 : i32, i32, i32
  }
  func.func @transform_6(%arg0: i32) -> (i32, i32) {
    %c0_i32 = arith.constant 0 : i32
    %c0_i32_0 = arith.constant 0 : i32
    %c0_i32_1 = arith.constant 0 : i32
    return %c0_i32, %c0_i32_0 : i32, i32
  }
  func.func @transform_7(%arg0: i32) -> (i32, i32, i32) {
    %c0_i32 = arith.constant 0 : i32
    %c0_i32_0 = arith.constant 0 : i32
    %c0_i32_1 = arith.constant 0 : i32
    %c0_i32_2 = arith.constant 0 : i32
    return %c0_i32, %c0_i32_0, %c0_i32_1 : i32, i32, i32
  }
  func.func @transform_8(%arg0: i32) -> (i32, i32) {
    %c0_i32 = arith.constant 0 : i32
    %c0_i32_0 = arith.constant 0 : i32
    %c0_i32_1 = arith.constant 0 : i32
    return %c0_i32, %c0_i32_0 : i32, i32
  }
  func.func @transform_9(%arg0: i32) -> (i32, i32) {
    %c0_i32 = arith.constant 0 : i32
    %c0_i32_0 = arith.constant 0 : i32
    %c0_i32_1 = arith.constant 0 : i32
    return %c0_i32, %c0_i32_0 : i32, i32
  }
  func.func @transform_10(%arg0: i32) -> (i32, i32) {
    %c0_i32 = arith.constant 0 : i32
    %c0_i32_0 = arith.constant 0 : i32
    %c0_i32_1 = arith.constant 0 : i32
    return %c0_i32, %c0_i32_0 : i32, i32
  }
  func.func @transform_11(%arg0: i32) -> (i32, i32) {
    %c0_i32 = arith.constant 0 : i32
    %c0_i32_0 = arith.constant 0 : i32
    %c0_i32_1 = arith.constant 0 : i32
    return %c0_i32, %c0_i32_0 : i32, i32
  }
  func.func @transform_12(%arg0: i32) -> (i32, i32) {
    %c0_i32 = arith.constant 0 : i32
    %c0_i32_0 = arith.constant 0 : i32
    %c0_i32_1 = arith.constant 0 : i32
    return %c0_i32, %c0_i32_0 : i32, i32
  }
  func.func @transform_13(%arg0: i32) -> (i32, i32) {
    %c0_i32 = arith.constant 0 : i32
    %c0_i32_0 = arith.constant 0 : i32
    %c0_i32_1 = arith.constant 0 : i32
    return %c0_i32, %c0_i32_0 : i32, i32
  }
  func.func @transform_14(%arg0: i32) -> (i32, i32) {
    %c0_i32 = arith.constant 0 : i32
    %c0_i32_0 = arith.constant 0 : i32
    return %arg0, %c0_i32 : i32, i32
  }
}

</mosaic_0001>

<llo_original>
// kernel: cnn_forward.1
$region0: #{cnn_forward.1}
  #allocation0 [shape = 'u32[]', space=smem, size = 0x4, offset = 0x4, fixed_abs, tag = 'smem constant byte address 0x4 - core index']
  #allocation1 [shape = 'u32[72,128]{1,0:T(1,128)}', space=vmem, size = 0x9000, scoped, tag = 'internal scratch']
  %s0 = inlined_call_operand.vmem [shape: f32[128,6], index: 0, kind: input, shape index: {}]
  %s1 = inlined_call_operand.vmem [shape: f32[3,6,18], index: 1, kind: input, shape index: {}]
  %s2 = inlined_call_operand.vmem [shape: f32[1,18], index: 2, kind: input, shape index: {}]
  %s3 = inlined_call_operand.vmem [shape: f32[3,18,18], index: 3, kind: input, shape index: {}]
  %s4 = inlined_call_operand.vmem [shape: f32[1,18], index: 4, kind: input, shape index: {}]
  %s5 = inlined_call_operand.vmem [shape: f32[3,18,2], index: 5, kind: input, shape index: {}]
  %s6 = inlined_call_operand.vmem [shape: f32[1,2], index: 6, kind: input, shape index: {}]
  %s7 = inlined_call_operand.vmem [shape: f32[10,2,32], index: 7, kind: input, shape index: {}]
  %s8 = inlined_call_operand.vmem [shape: f32[1,32], index: 8, kind: input, shape index: {}]
  %s9 = inlined_call_operand.vmem [shape: f32[32,16], index: 9, kind: input, shape index: {}]
  %s10 = inlined_call_operand.vmem [shape: f32[1,16], index: 10, kind: input, shape index: {}]
  %s11 = inlined_call_operand.vmem [shape: f32[16,8], index: 11, kind: input, shape index: {}]
  %s12 = inlined_call_operand.vmem [shape: f32[1,8], index: 12, kind: input, shape index: {}]
  %s13 = inlined_call_operand.vmem [shape: f32[8,1], index: 13, kind: input, shape index: {}]
  %s14 = inlined_call_operand.vmem [shape: f32[8,1], index: 14, kind: output, shape index: {}]
  %s15 = sld [smem:[#allocation0]]
  $region66: #{cnn_forward.1} parent=0
    _
  %s17 = ssub.s32 1, %s15
  %s18 = scalar_select 0, %s17, %s15
  // Predicated region
  $region2: #{cnn_forward.1} parent=0 // pred_check
    _
  $region3: #{cnn_forward.1} parent=0 // pred_check_branch
    %20 = sbr.rel (0) target = $region5
  $region4: #{cnn_forward.1} parent=0 // pred_region
    _
  $region5: #{cnn_forward.1} parent=0 // pred_fallthru
    _
  // Predicated region
  $region6: #{cnn_forward.1} parent=0 // pred_check
    _
  $region7: #{cnn_forward.1} parent=0 // pred_check_branch
    %22 = sbr.rel (0) target = $region9
  $region8: #{cnn_forward.1} parent=0 // pred_region
    _
  $region9: #{cnn_forward.1} parent=0 // pred_fallthru
    _
  // Predicated region
  $region10: #{cnn_forward.1} parent=0 // pred_check
    _
  $region11: #{cnn_forward.1} parent=0 // pred_check_branch
    %24 = sbr.rel (0) target = $region13
  $region12: #{cnn_forward.1} parent=0 // pred_region
    _
  $region13: #{cnn_forward.1} parent=0 // pred_fallthru
    _
  // Predicated region
  $region14: #{cnn_forward.1} parent=0 // pred_check
    _
  $region15: #{cnn_forward.1} parent=0 // pred_check_branch
    %26 = sbr.rel (0) target = $region17
  $region16: #{cnn_forward.1} parent=0 // pred_region
    _
  $region17: #{cnn_forward.1} parent=0 // pred_fallthru
    _
  // Predicated region
  $region18: #{cnn_forward.1} parent=0 // pred_check
    _
  $region19: #{cnn_forward.1} parent=0 // pred_check_branch
    %28 = sbr.rel (0) target = $region21
  $region20: #{cnn_forward.1} parent=0 // pred_region
    _
  $region21: #{cnn_forward.1} parent=0 // pred_fallthru
    _
  // Predicated region
  $region22: #{cnn_forward.1} parent=0 // pred_check
    _
  $region23: #{cnn_forward.1} parent=0 // pred_check_branch
    %30 = sbr.rel (0) target = $region25
  $region24: #{cnn_forward.1} parent=0 // pred_region
    _
  $region25: #{cnn_forward.1} parent=0 // pred_fallthru
    _
  // Predicated region
  $region26: #{cnn_forward.1} parent=0 // pred_check
    _
  $region27: #{cnn_forward.1} parent=0 // pred_check_branch
    %32 = sbr.rel (0) target = $region29
  $region28: #{cnn_forward.1} parent=0 // pred_region
    _
  $region29: #{cnn_forward.1} parent=0 // pred_fallthru
    _
  // Predicated region
  $region30: #{cnn_forward.1} parent=0 // pred_check
    _
  $region31: #{cnn_forward.1} parent=0 // pred_check_branch
    %34 = sbr.rel (0) target = $region33
  $region32: #{cnn_forward.1} parent=0 // pred_region
    _
  $region33: #{cnn_forward.1} parent=0 // pred_fallthru
    _
  // Predicated region
  $region34: #{cnn_forward.1} parent=0 // pred_check
    _
  $region35: #{cnn_forward.1} parent=0 // pred_check_branch
    %36 = sbr.rel (0) target = $region37
  $region36: #{cnn_forward.1} parent=0 // pred_region
    _
  $region37: #{cnn_forward.1} parent=0 // pred_fallthru
    _
  // Predicated region
  $region38: #{cnn_forward.1} parent=0 // pred_check
    _
  $region39: #{cnn_forward.1} parent=0 // pred_check_branch
    %38 = sbr.rel (0) target = $region41
  $region40: #{cnn_forward.1} parent=0 // pred_region
    _
  $region41: #{cnn_forward.1} parent=0 // pred_fallthru
    _
  // Predicated region
  $region42: #{cnn_forward.1} parent=0 // pred_check
    _
  $region43: #{cnn_forward.1} parent=0 // pred_check_branch
    %40 = sbr.rel (0) target = $region45
  $region44: #{cnn_forward.1} parent=0 // pred_region
    _
  $region45: #{cnn_forward.1} parent=0 // pred_fallthru
    _
  // Predicated region
  $region46: #{cnn_forward.1} parent=0 // pred_check
    _
  $region47: #{cnn_forward.1} parent=0 // pred_check_branch
    %42 = sbr.rel (0) target = $region49
  $region48: #{cnn_forward.1} parent=0 // pred_region
    _
  $region49: #{cnn_forward.1} parent=0 // pred_fallthru
    _
  // Predicated region
  $region50: #{cnn_forward.1} parent=0 // pred_check
    _
  $region51: #{cnn_forward.1} parent=0 // pred_check_branch
    %44 = sbr.rel (0) target = $region53
  $region52: #{cnn_forward.1} parent=0 // pred_region
    _
  $region53: #{cnn_forward.1} parent=0 // pred_fallthru
    _
  // Predicated region
  $region54: #{cnn_forward.1} parent=0 // pred_check
    _
  $region55: #{cnn_forward.1} parent=0 // pred_check_branch
    %46 = sbr.rel (0) target = $region57
  $region56: #{cnn_forward.1} parent=0 // pred_region
    _
  $region57: #{cnn_forward.1} parent=0 // pred_fallthru
    _
  %v47 = vld [vmem:[%s0] sm:$0xff]
  %v48 = vld [vmem:[%s0 + $0x8] sm:$0xff]
  %v49 = vld [vmem:[%s0 + $0x10] sm:$0xff]
  %v50 = vld [vmem:[%s0 + $0x18] sm:$0xff]
  %v51 = vld [vmem:[%s0 + $0x20] sm:$0xff]
  %v52 = vld [vmem:[%s0 + $0x28] sm:$0xff]
  %v53 = vld [vmem:[%s0 + $0x30] sm:$0xff]
  %v54 = vld [vmem:[%s0 + $0x38] sm:$0xff]
  %v55 = vld [vmem:[%s0 + $0x40] sm:$0xff]
  %v56 = vld [vmem:[%s0 + $0x48] sm:$0xff]
  %v57 = vld [vmem:[%s0 + $0x50] sm:$0xff]
  %v58 = vld [vmem:[%s0 + $0x58] sm:$0xff]
  %v59 = vld [vmem:[%s0 + $0x60] sm:$0xff]
  %v60 = vld [vmem:[%s0 + $0x68] sm:$0xff]
  %v61 = vld [vmem:[%s0 + $0x70] sm:$0xff]
  %v62 = vld [vmem:[%s0 + $0x78] sm:$0xff]
  %v63 = vld [vmem:[%s1] sm:$0x3f]
  %s64 = scalar_lea.vmem %s1, 8
  %v65 = vld [vmem:[%s64] sm:$0x3f]
  %vm66 = vcmask 48128
  %v68 = vsel %vm66, %v48, 0
  %v71 = vsel %vm66, %v49, 0
  %v74 = vsel %vm66, %v50, 0
  %v77 = vsel %vm66, %v51, 0
  %v80 = vsel %vm66, %v52, 0
  %v83 = vsel %vm66, %v53, 0
  %v86 = vsel %vm66, %v54, 0
  %v89 = vsel %vm66, %v55, 0
  %v92 = vsel %vm66, %v56, 0
  %v95 = vsel %vm66, %v57, 0
  %v98 = vsel %vm66, %v58, 0
  %v101 = vsel %vm66, %v59, 0
  %v104 = vsel %vm66, %v60, 0
  %v107 = vsel %vm66, %v61, 0
  %vm109 = vcmask 1045504
  %v111 = vsel %vm109, %v65, 0
  %113 = vmatpush.msra.mxu0 0.0
  %114 = vmatpush.msra.mxu0 0.0
  %115 = vmatpush.msra.mxu0 0.0
  %116 = vmatpush.msra.mxu0 0.0
  %117 = vmatpush.msra.mxu0 0.0
  %118 = vmatpush.msra.mxu0 0.0
  %119 = vmatpush.msra.mxu0 0.0
  %120 = vmatpush.msra.mxu0 0.0
  %121 = vmatpush.msra.mxu0 0.0
  %122 = vmatpush.msra.mxu0 0.0
  %123 = vmatpush.msra.mxu0 0.0
  %124 = vmatpush.msra.mxu0 0.0
  %125 = vmatpush.msra.mxu0 0.0
  %126 = vmatpush.msra.mxu0 0.0
  %127 = vmatpush.msra.mxu0 0.0
  %128 = vmatpush.msra.mxu0 %v111
  %129 = vmatmul.f32.gmra.mxu0 %v68
  %v130 = vpop.f32.mrf.mxu0
  %v131 = vadd.f32 0.0, %v130
  %132 = vmatmul.f32.gmra.mxu0 %v71
  %v133 = vpop.f32.mrf.mxu0
  %v134 = vadd.f32 0.0, %v133
  %135 = vmatmul.f32.gmra.mxu0 %v74
  %v136 = vpop.f32.mrf.mxu0
  %v137 = vadd.f32 0.0, %v136
  %138 = vmatmul.f32.gmra.mxu0 %v77
  %v139 = vpop.f32.mrf.mxu0
  %v140 = vadd.f32 0.0, %v139
  %141 = vmatmul.f32.gmra.mxu0 %v80
  %v142 = vpop.f32.mrf.mxu0
  %v143 = vadd.f32 0.0, %v142
  %144 = vmatmul.f32.gmra.mxu0 %v83
  %v145 = vpop.f32.mrf.mxu0
  %v146 = vadd.f32 0.0, %v145
  %147 = vmatmul.f32.gmra.mxu0 %v86
  %v148 = vpop.f32.mrf.mxu0
  %v149 = vadd.f32 0.0, %v148
  %150 = vmatmul.f32.gmra.mxu0 %v89
  %v151 = vpop.f32.mrf.mxu0
  %v152 = vadd.f32 0.0, %v151
  %153 = vmatmul.f32.gmra.mxu0 %v92
  %v154 = vpop.f32.mrf.mxu0
  %v155 = vadd.f32 0.0, %v154
  %156 = vmatmul.f32.gmra.mxu0 %v95
  %v157 = vpop.f32.mrf.mxu0
  %v158 = vadd.f32 0.0, %v157
  %159 = vmatmul.f32.gmra.mxu0 %v98
  %v160 = vpop.f32.mrf.mxu0
  %v161 = vadd.f32 0.0, %v160
  %162 = vmatmul.f32.gmra.mxu0 %v101
  %v163 = vpop.f32.mrf.mxu0
  %v164 = vadd.f32 0.0, %v163
  %165 = vmatmul.f32.gmra.mxu0 %v104
  %v166 = vpop.f32.mrf.mxu0
  %v167 = vadd.f32 0.0, %v166
  %168 = vmatmul.f32.gmra.mxu0 %v107
  %v169 = vpop.f32.mrf.mxu0
  %v170 = vadd.f32 0.0, %v169
  %171 = vdwg.mxu0
  %v173 = vsel %vm66, %v47, 0
  %v176 = vsel %vm109, %v63, 0
  %178 = vmatpush.msra.mxu0 0.0
  %179 = vmatpush.msra.mxu0 0.0
  %180 = vmatpush.msra.mxu0 0.0
  %181 = vmatpush.msra.mxu0 0.0
  %182 = vmatpush.msra.mxu0 0.0
  %183 = vmatpush.msra.mxu0 0.0
  %184 = vmatpush.msra.mxu0 0.0
  %185 = vmatpush.msra.mxu0 0.0
  %186 = vmatpush.msra.mxu0 0.0
  %187 = vmatpush.msra.mxu0 0.0
  %188 = vmatpush.msra.mxu0 0.0
  %189 = vmatpush.msra.mxu0 0.0
  %190 = vmatpush.msra.mxu0 0.0
  %191 = vmatpush.msra.mxu0 0.0
  %192 = vmatpush.msra.mxu0 0.0
  %193 = vmatpush.msra.mxu0 %v176
  %194 = vmatmul.f32.gmra.mxu0 %v173
  %v195 = vpop.f32.mrf.mxu0
  %v196 = vadd.f32 %v131, %v195
  %197 = vmatmul.f32.gmra.mxu0 %v68
  %v198 = vpop.f32.mrf.mxu0
  %v199 = vadd.f32 %v134, %v198
  %200 = vmatmul.f32.gmra.mxu0 %v71
  %v201 = vpop.f32.mrf.mxu0
  %v202 = vadd.f32 %v137, %v201
  %203 = vmatmul.f32.gmra.mxu0 %v74
  %v204 = vpop.f32.mrf.mxu0
  %v205 = vadd.f32 %v140, %v204
  %206 = vmatmul.f32.gmra.mxu0 %v77
  %v207 = vpop.f32.mrf.mxu0
  %v208 = vadd.f32 %v143, %v207
  %209 = vmatmul.f32.gmra.mxu0 %v80
  %v210 = vpop.f32.mrf.mxu0
  %v211 = vadd.f32 %v146, %v210
  %212 = vmatmul.f32.gmra.mxu0 %v83
  %v213 = vpop.f32.mrf.mxu0
  %v214 = vadd.f32 %v149, %v213
  %215 = vmatmul.f32.gmra.mxu0 %v86
  %v216 = vpop.f32.mrf.mxu0
  %v217 = vadd.f32 %v152, %v216
  %218 = vmatmul.f32.gmra.mxu0 %v89
  %v219 = vpop.f32.mrf.mxu0
  %v220 = vadd.f32 %v155, %v219
  %221 = vmatmul.f32.gmra.mxu0 %v92
  %v222 = vpop.f32.mrf.mxu0
  %v223 = vadd.f32 %v158, %v222
  %224 = vmatmul.f32.gmra.mxu0 %v95
  %v225 = vpop.f32.mrf.mxu0
  %v226 = vadd.f32 %v161, %v225
  %227 = vmatmul.f32.gmra.mxu0 %v98
  %v228 = vpop.f32.mrf.mxu0
  %v229 = vadd.f32 %v164, %v228
  %230 = vmatmul.f32.gmra.mxu0 %v101
  %v231 = vpop.f32.mrf.mxu0
  %v232 = vadd.f32 %v167, %v231
  %233 = vmatmul.f32.gmra.mxu0 %v104
  %v234 = vpop.f32.mrf.mxu0
  %v235 = vadd.f32 %v170, %v234
  %236 = vdwg.mxu0
  %s237 = scalar_lea.vmem %s1, 16
  %v238 = vld [vmem:[%s237] sm:$0x3f]
  %v240 = vsel %vm66, %v62, 0
  %v243 = vsel %vm109, %v238, 0
  %245 = vmatpush.msra.mxu0 0.0
  %246 = vmatpush.msra.mxu0 0.0
  %247 = vmatpush.msra.mxu0 0.0
  %248 = vmatpush.msra.mxu0 0.0
  %249 = vmatpush.msra.mxu0 0.0
  %250 = vmatpush.msra.mxu0 0.0
  %251 = vmatpush.msra.mxu0 0.0
  %252 = vmatpush.msra.mxu0 0.0
  %253 = vmatpush.msra.mxu0 0.0
  %254 = vmatpush.msra.mxu0 0.0
  %255 = vmatpush.msra.mxu0 0.0
  %256 = vmatpush.msra.mxu0 0.0
  %257 = vmatpush.msra.mxu0 0.0
  %258 = vmatpush.msra.mxu0 0.0
  %259 = vmatpush.msra.mxu0 0.0
  %260 = vmatpush.msra.mxu0 %v243
  %261 = vmatmul.f32.gmra.mxu0 %v71
  %v262 = vpop.f32.mrf.mxu0
  %v263 = vadd.f32 0.0, %v262
  %264 = vmatmul.f32.gmra.mxu0 %v74
  %v265 = vpop.f32.mrf.mxu0
  %v266 = vadd.f32 0.0, %v265
  %267 = vmatmul.f32.gmra.mxu0 %v77
  %v268 = vpop.f32.mrf.mxu0
  %v269 = vadd.f32 0.0, %v268
  %270 = vmatmul.f32.gmra.mxu0 %v80
  %v271 = vpop.f32.mrf.mxu0
  %v272 = vadd.f32 0.0, %v271
  %273 = vmatmul.f32.gmra.mxu0 %v83
  %v274 = vpop.f32.mrf.mxu0
  %v275 = vadd.f32 0.0, %v274
  %276 = vmatmul.f32.gmra.mxu0 %v86
  %v277 = vpop.f32.mrf.mxu0
  %v278 = vadd.f32 0.0, %v277
  %279 = vmatmul.f32.gmra.mxu0 %v89
  %v280 = vpop.f32.mrf.mxu0
  %v281 = vadd.f32 0.0, %v280
  %282 = vmatmul.f32.gmra.mxu0 %v92
  %v283 = vpop.f32.mrf.mxu0
  %v284 = vadd.f32 0.0, %v283
  %285 = vmatmul.f32.gmra.mxu0 %v95
  %v286 = vpop.f32.mrf.mxu0
  %v287 = vadd.f32 0.0, %v286
  %288 = vmatmul.f32.gmra.mxu0 %v98
  %v289 = vpop.f32.mrf.mxu0
  %v290 = vadd.f32 0.0, %v289
  %291 = vmatmul.f32.gmra.mxu0 %v101
  %v292 = vpop.f32.mrf.mxu0
  %v293 = vadd.f32 0.0, %v292
  %294 = vmatmul.f32.gmra.mxu0 %v104
  %v295 = vpop.f32.mrf.mxu0
  %v296 = vadd.f32 0.0, %v295
  %297 = vmatmul.f32.gmra.mxu0 %v107
  %v298 = vpop.f32.mrf.mxu0
  %v299 = vadd.f32 0.0, %v298
  %300 = vmatmul.f32.gmra.mxu0 %v240
  %v301 = vpop.f32.mrf.mxu0
  %v302 = vadd.f32 0.0, %v301
  %303 = vdwg.mxu0
  %v304 = vadd.f32 %v196, %v263
  %v305 = vadd.f32 %v199, %v266
  %v306 = vadd.f32 %v202, %v269
  %v307 = vadd.f32 %v205, %v272
  %v308 = vadd.f32 %v208, %v275
  %v309 = vadd.f32 %v211, %v278
  %v310 = vadd.f32 %v214, %v281
  %v311 = vadd.f32 %v217, %v284
  %v312 = vadd.f32 %v220, %v287
  %v313 = vadd.f32 %v223, %v290
  %v314 = vadd.f32 %v226, %v293
  %v315 = vadd.f32 %v229, %v296
  %v316 = vadd.f32 %v232, %v299
  %v317 = vadd.f32 %v235, %v302
  %v318 = vld [vmem:[%s2] sm:$0x1]
  %v320 = vperm.slane %v318, 0
  %v322 = vadd.f32 %v304, %v320
  %v323 = vadd.f32 %v305, %v320
  %v324 = vadd.f32 %v306, %v320
  %v325 = vadd.f32 %v307, %v320
  %v326 = vadd.f32 %v308, %v320
  %v327 = vadd.f32 %v309, %v320
  %v328 = vadd.f32 %v310, %v320
  %v329 = vadd.f32 %v311, %v320
  %v330 = vadd.f32 %v312, %v320
  %v331 = vadd.f32 %v313, %v320
  %v332 = vadd.f32 %v314, %v320
  %v333 = vadd.f32 %v315, %v320
  %v334 = vadd.f32 %v316, %v320
  %v335 = vadd.f32 %v317, %v320
  %v336 = vmax.f32 %v322, 0.0
  %v337 = vmax.f32 %v323, 0.0
  %v338 = vmax.f32 %v324, 0.0
  %v339 = vmax.f32 %v325, 0.0
  %v340 = vmax.f32 %v326, 0.0
  %v341 = vmax.f32 %v327, 0.0
  %v342 = vmax.f32 %v328, 0.0
  %v343 = vmax.f32 %v329, 0.0
  %v344 = vmax.f32 %v330, 0.0
  %v345 = vmax.f32 %v331, 0.0
  %v346 = vmax.f32 %v332, 0.0
  %v347 = vmax.f32 %v333, 0.0
  %v348 = vmax.f32 %v334, 0.0
  %v349 = vmax.f32 %v335, 0.0
  %v350 = vld [vmem:[%s3] sm:$0xff]
  %v351 = vld [vmem:[%s3 + $0x8] sm:$0xff]
  %v352 = vld [vmem:[%s3 + $0x10] sm:$0x3]
  %s353 = scalar_lea.vmem %s3, 24
  %v354 = vld [vmem:[%s353] sm:$0xff]
  %v355 = vld [vmem:[%s353 + $0x8] sm:$0xff]
  %v356 = vld [vmem:[%s353 + $0x10] sm:$0x3]
  %vm357 = vcmask 146432
  %v359 = vsel %vm357, %v337, 0
  %v362 = vsel %vm357, %v338, 0
  %v365 = vsel %vm357, %v339, 0
  %v368 = vsel %vm357, %v340, 0
  %v371 = vsel %vm357, %v341, 0
  %v374 = vsel %vm357, %v342, 0
  %v377 = vsel %vm357, %v343, 0
  %v380 = vsel %vm357, %v344, 0
  %v383 = vsel %vm357, %v345, 0
  %v386 = vsel %vm357, %v346, 0
  %v389 = vsel %vm357, %v347, 0
  %v392 = vsel %vm357, %v348, 0
  %vm394 = vcmask 1041408
  %v396 = vsel %vm394, %v356, 0
  %398 = vmatpush.msra.mxu0 0.0
  %399 = vmatpush.msra.mxu0 0.0
  %400 = vmatpush.msra.mxu0 0.0
  %401 = vmatpush.msra.mxu0 0.0
  %402 = vmatpush.msra.mxu0 0.0
  %403 = vmatpush.msra.mxu0 0.0
  %404 = vmatpush.msra.mxu0 0.0
  %405 = vmatpush.msra.mxu0 0.0
  %406 = vmatpush.msra.mxu0 0.0
  %407 = vmatpush.msra.mxu0 0.0
  %408 = vmatpush.msra.mxu0 0.0
  %409 = vmatpush.msra.mxu0 0.0
  %410 = vmatpush.msra.mxu0 0.0
  %411 = vmatpush.msra.mxu0 %v396
  %412 = vmatpush.msra.mxu0 %v355
  %413 = vmatpush.msra.mxu0 %v354
  %414 = vmatmul.f32.gmra.mxu0 %v359
  %v415 = vpop.f32.mrf.mxu0
  %v416 = vadd.f32 0.0, %v415
  %417 = vmatmul.f32.gmra.mxu0 %v362
  %v418 = vpop.f32.mrf.mxu0
  %v419 = vadd.f32 0.0, %v418
  %420 = vmatmul.f32.gmra.mxu0 %v365
  %v421 = vpop.f32.mrf.mxu0
  %v422 = vadd.f32 0.0, %v421
  %423 = vmatmul.f32.gmra.mxu0 %v368
  %v424 = vpop.f32.mrf.mxu0
  %v425 = vadd.f32 0.0, %v424
  %426 = vmatmul.f32.gmra.mxu0 %v371
  %v427 = vpop.f32.mrf.mxu0
  %v428 = vadd.f32 0.0, %v427
  %429 = vmatmul.f32.gmra.mxu0 %v374
  %v430 = vpop.f32.mrf.mxu0
  %v431 = vadd.f32 0.0, %v430
  %432 = vmatmul.f32.gmra.mxu0 %v377
  %v433 = vpop.f32.mrf.mxu0
  %v434 = vadd.f32 0.0, %v433
  %435 = vmatmul.f32.gmra.mxu0 %v380
  %v436 = vpop.f32.mrf.mxu0
  %v437 = vadd.f32 0.0, %v436
  %438 = vmatmul.f32.gmra.mxu0 %v383
  %v439 = vpop.f32.mrf.mxu0
  %v440 = vadd.f32 0.0, %v439
  %441 = vmatmul.f32.gmra.mxu0 %v386
  %v442 = vpop.f32.mrf.mxu0
  %v443 = vadd.f32 0.0, %v442
  %444 = vmatmul.f32.gmra.mxu0 %v389
  %v445 = vpop.f32.mrf.mxu0
  %v446 = vadd.f32 0.0, %v445
  %447 = vmatmul.f32.gmra.mxu0 %v392
  %v448 = vpop.f32.mrf.mxu0
  %v449 = vadd.f32 0.0, %v448
  %450 = vdwg.mxu0
  %v452 = vsel %vm357, %v336, 0
  %v455 = vsel %vm394, %v352, 0
  %457 = vmatpush.msra.mxu0 0.0
  %458 = vmatpush.msra.mxu0 0.0
  %459 = vmatpush.msra.mxu0 0.0
  %460 = vmatpush.msra.mxu0 0.0
  %461 = vmatpush.msra.mxu0 0.0
  %462 = vmatpush.msra.mxu0 0.0
  %463 = vmatpush.msra.mxu0 0.0
  %464 = vmatpush.msra.mxu0 0.0
  %465 = vmatpush.msra.mxu0 0.0
  %466 = vmatpush.msra.mxu0 0.0
  %467 = vmatpush.msra.mxu0 0.0
  %468 = vmatpush.msra.mxu0 0.0
  %469 = vmatpush.msra.mxu0 0.0
  %470 = vmatpush.msra.mxu0 %v455
  %471 = vmatpush.msra.mxu0 %v351
  %472 = vmatpush.msra.mxu0 %v350
  %473 = vmatmul.f32.gmra.mxu0 %v452
  %v474 = vpop.f32.mrf.mxu0
  %v475 = vadd.f32 %v416, %v474
  %476 = vmatmul.f32.gmra.mxu0 %v359
  %v477 = vpop.f32.mrf.mxu0
  %v478 = vadd.f32 %v419, %v477
  %479 = vmatmul.f32.gmra.mxu0 %v362
  %v480 = vpop.f32.mrf.mxu0
  %v481 = vadd.f32 %v422, %v480
  %482 = vmatmul.f32.gmra.mxu0 %v365
  %v483 = vpop.f32.mrf.mxu0
  %v484 = vadd.f32 %v425, %v483
  %485 = vmatmul.f32.gmra.mxu0 %v368
  %v486 = vpop.f32.mrf.mxu0
  %v487 = vadd.f32 %v428, %v486
  %488 = vmatmul.f32.gmra.mxu0 %v371
  %v489 = vpop.f32.mrf.mxu0
  %v490 = vadd.f32 %v431, %v489
  %491 = vmatmul.f32.gmra.mxu0 %v374
  %v492 = vpop.f32.mrf.mxu0
  %v493 = vadd.f32 %v434, %v492
  %494 = vmatmul.f32.gmra.mxu0 %v377
  %v495 = vpop.f32.mrf.mxu0
  %v496 = vadd.f32 %v437, %v495
  %497 = vmatmul.f32.gmra.mxu0 %v380
  %v498 = vpop.f32.mrf.mxu0
  %v499 = vadd.f32 %v440, %v498
  %500 = vmatmul.f32.gmra.mxu0 %v383
  %v501 = vpop.f32.mrf.mxu0
  %v502 = vadd.f32 %v443, %v501
  %503 = vmatmul.f32.gmra.mxu0 %v386
  %v504 = vpop.f32.mrf.mxu0
  %v505 = vadd.f32 %v446, %v504
  %506 = vmatmul.f32.gmra.mxu0 %v389
  %v507 = vpop.f32.mrf.mxu0
  %v508 = vadd.f32 %v449, %v507
  %509 = vdwg.mxu0
  %s510 = scalar_lea.vmem %s3, 48
  %v511 = vld [vmem:[%s510] sm:$0xff]
  %v512 = vld [vmem:[%s510 + $0x8] sm:$0xff]
  %v513 = vld [vmem:[%s510 + $0x10] sm:$0x3]
  %v515 = vsel %vm357, %v349, 0
  %v518 = vsel %vm394, %v513, 0
  %520 = vmatpush.msra.mxu0 0.0
  %521 = vmatpush.msra.mxu0 0.0
  %522 = vmatpush.msra.mxu0 0.0
  %523 = vmatpush.msra.mxu0 0.0
  %524 = vmatpush.msra.mxu0 0.0
  %525 = vmatpush.msra.mxu0 0.0
  %526 = vmatpush.msra.mxu0 0.0
  %527 = vmatpush.msra.mxu0 0.0
  %528 = vmatpush.msra.mxu0 0.0
  %529 = vmatpush.msra.mxu0 0.0
  %530 = vmatpush.msra.mxu0 0.0
  %531 = vmatpush.msra.mxu0 0.0
  %532 = vmatpush.msra.mxu0 0.0
  %533 = vmatpush.msra.mxu0 %v518
  %534 = vmatpush.msra.mxu0 %v512
  %535 = vmatpush.msra.mxu0 %v511
  %536 = vmatmul.f32.gmra.mxu0 %v362
  %v537 = vpop.f32.mrf.mxu0
  %v538 = vadd.f32 0.0, %v537
  %539 = vmatmul.f32.gmra.mxu0 %v365
  %v540 = vpop.f32.mrf.mxu0
  %v541 = vadd.f32 0.0, %v540
  %542 = vmatmul.f32.gmra.mxu0 %v368
  %v543 = vpop.f32.mrf.mxu0
  %v544 = vadd.f32 0.0, %v543
  %545 = vmatmul.f32.gmra.mxu0 %v371
  %v546 = vpop.f32.mrf.mxu0
  %v547 = vadd.f32 0.0, %v546
  %548 = vmatmul.f32.gmra.mxu0 %v374
  %v549 = vpop.f32.mrf.mxu0
  %v550 = vadd.f32 0.0, %v549
  %551 = vmatmul.f32.gmra.mxu0 %v377
  %v552 = vpop.f32.mrf.mxu0
  %v553 = vadd.f32 0.0, %v552
  %554 = vmatmul.f32.gmra.mxu0 %v380
  %v555 = vpop.f32.mrf.mxu0
  %v556 = vadd.f32 0.0, %v555
  %557 = vmatmul.f32.gmra.mxu0 %v383
  %v558 = vpop.f32.mrf.mxu0
  %v559 = vadd.f32 0.0, %v558
  %560 = vmatmul.f32.gmra.mxu0 %v386
  %v561 = vpop.f32.mrf.mxu0
  %v562 = vadd.f32 0.0, %v561
  %563 = vmatmul.f32.gmra.mxu0 %v389
  %v564 = vpop.f32.mrf.mxu0
  %v565 = vadd.f32 0.0, %v564
  %566 = vmatmul.f32.gmra.mxu0 %v392
  %v567 = vpop.f32.mrf.mxu0
  %v568 = vadd.f32 0.0, %v567
  %569 = vmatmul.f32.gmra.mxu0 %v515
  %v570 = vpop.f32.mrf.mxu0
  %v571 = vadd.f32 0.0, %v570
  %572 = vdwg.mxu0
  %v573 = vadd.f32 %v475, %v538
  %v574 = vadd.f32 %v478, %v541
  %v575 = vadd.f32 %v481, %v544
  %v576 = vadd.f32 %v484, %v547
  %v577 = vadd.f32 %v487, %v550
  %v578 = vadd.f32 %v490, %v553
  %v579 = vadd.f32 %v493, %v556
  %v580 = vadd.f32 %v496, %v559
  %v581 = vadd.f32 %v499, %v562
  %v582 = vadd.f32 %v502, %v565
  %v583 = vadd.f32 %v505, %v568
  %v584 = vadd.f32 %v508, %v571
  %v585 = vld [vmem:[%s4] sm:$0x1]
  %v587 = vperm.slane %v585, 0
  %v589 = vadd.f32 %v573, %v587
  %v590 = vadd.f32 %v574, %v587
  %v591 = vadd.f32 %v575, %v587
  %v592 = vadd.f32 %v576, %v587
  %v593 = vadd.f32 %v577, %v587
  %v594 = vadd.f32 %v578, %v587
  %v595 = vadd.f32 %v579, %v587
  %v596 = vadd.f32 %v580, %v587
  %v597 = vadd.f32 %v581, %v587
  %v598 = vadd.f32 %v582, %v587
  %v599 = vadd.f32 %v583, %v587
  %v600 = vadd.f32 %v584, %v587
  %v601 = vmax.f32 %v589, 0.0
  %v602 = vmax.f32 %v590, 0.0
  %v603 = vmax.f32 %v591, 0.0
  %v604 = vmax.f32 %v592, 0.0
  %v605 = vmax.f32 %v593, 0.0
  %v606 = vmax.f32 %v594, 0.0
  %v607 = vmax.f32 %v595, 0.0
  %v608 = vmax.f32 %v596, 0.0
  %v609 = vmax.f32 %v597, 0.0
  %v610 = vmax.f32 %v598, 0.0
  %v611 = vmax.f32 %v599, 0.0
  %v612 = vmax.f32 %v600, 0.0
  %v613 = vld [vmem:[%s5] sm:$0xff]
  %v614 = vld [vmem:[%s5 + $0x8] sm:$0xff]
  %v615 = vld [vmem:[%s5 + $0x10] sm:$0x3]
  %s616 = scalar_lea.vmem %s5, 24
  %v617 = vld [vmem:[%s616] sm:$0xff]
  %v618 = vld [vmem:[%s616 + $0x8] sm:$0xff]
  %v619 = vld [vmem:[%s616 + $0x10] sm:$0x3]
  %v621 = vsel %vm357, %v602, 0
  %v624 = vsel %vm357, %v603, 0
  %v627 = vsel %vm357, %v604, 0
  %v630 = vsel %vm357, %v605, 0
  %v633 = vsel %vm357, %v606, 0
  %v636 = vsel %vm357, %v607, 0
  %v639 = vsel %vm357, %v608, 0
  %v642 = vsel %vm357, %v609, 0
  %v645 = vsel %vm357, %v610, 0
  %v648 = vsel %vm357, %v611, 0
  %v651 = vsel %vm394, %v619, 0
  %653 = vmatpush.msra.mxu0 0.0
  %654 = vmatpush.msra.mxu0 0.0
  %655 = vmatpush.msra.mxu0 0.0
  %656 = vmatpush.msra.mxu0 0.0
  %657 = vmatpush.msra.mxu0 0.0
  %658 = vmatpush.msra.mxu0 0.0
  %659 = vmatpush.msra.mxu0 0.0
  %660 = vmatpush.msra.mxu0 0.0
  %661 = vmatpush.msra.mxu0 0.0
  %662 = vmatpush.msra.mxu0 0.0
  %663 = vmatpush.msra.mxu0 0.0
  %664 = vmatpush.msra.mxu0 0.0
  %665 = vmatpush.msra.mxu0 0.0
  %666 = vmatpush.msra.mxu0 %v651
  %667 = vmatpush.msra.mxu0 %v618
  %668 = vmatpush.msra.mxu0 %v617
  %669 = vmatmul.f32.gmra.mxu0 %v621
  %v670 = vpop.f32.mrf.mxu0
  %v671 = vadd.f32 0.0, %v670
  %672 = vmatmul.f32.gmra.mxu0 %v624
  %v673 = vpop.f32.mrf.mxu0
  %v674 = vadd.f32 0.0, %v673
  %675 = vmatmul.f32.gmra.mxu0 %v627
  %v676 = vpop.f32.mrf.mxu0
  %v677 = vadd.f32 0.0, %v676
  %678 = vmatmul.f32.gmra.mxu0 %v630
  %v679 = vpop.f32.mrf.mxu0
  %v680 = vadd.f32 0.0, %v679
  %681 = vmatmul.f32.gmra.mxu0 %v633
  %v682 = vpop.f32.mrf.mxu0
  %v683 = vadd.f32 0.0, %v682
  %684 = vmatmul.f32.gmra.mxu0 %v636
  %v685 = vpop.f32.mrf.mxu0
  %v686 = vadd.f32 0.0, %v685
  %687 = vmatmul.f32.gmra.mxu0 %v639
  %v688 = vpop.f32.mrf.mxu0
  %v689 = vadd.f32 0.0, %v688
  %690 = vmatmul.f32.gmra.mxu0 %v642
  %v691 = vpop.f32.mrf.mxu0
  %v692 = vadd.f32 0.0, %v691
  %693 = vmatmul.f32.gmra.mxu0 %v645
  %v694 = vpop.f32.mrf.mxu0
  %v695 = vadd.f32 0.0, %v694
  %696 = vmatmul.f32.gmra.mxu0 %v648
  %v697 = vpop.f32.mrf.mxu0
  %v698 = vadd.f32 0.0, %v697
  %699 = vdwg.mxu0
  %v701 = vsel %vm357, %v601, 0
  %v704 = vsel %vm394, %v615, 0
  %706 = vmatpush.msra.mxu0 0.0
  %707 = vmatpush.msra.mxu0 0.0
  %708 = vmatpush.msra.mxu0 0.0
  %709 = vmatpush.msra.mxu0 0.0
  %710 = vmatpush.msra.mxu0 0.0
  %711 = vmatpush.msra.mxu0 0.0
  %712 = vmatpush.msra.mxu0 0.0
  %713 = vmatpush.msra.mxu0 0.0
  %714 = vmatpush.msra.mxu0 0.0
  %715 = vmatpush.msra.mxu0 0.0
  %716 = vmatpush.msra.mxu0 0.0
  %717 = vmatpush.msra.mxu0 0.0
  %718 = vmatpush.msra.mxu0 0.0
  %719 = vmatpush.msra.mxu0 %v704
  %720 = vmatpush.msra.mxu0 %v614
  %721 = vmatpush.msra.mxu0 %v613
  %722 = vmatmul.f32.gmra.mxu0 %v701
  %v723 = vpop.f32.mrf.mxu0
  %v724 = vadd.f32 %v671, %v723
  %725 = vmatmul.f32.gmra.mxu0 %v621
  %v726 = vpop.f32.mrf.mxu0
  %v727 = vadd.f32 %v674, %v726
  %728 = vmatmul.f32.gmra.mxu0 %v624
  %v729 = vpop.f32.mrf.mxu0
  %v730 = vadd.f32 %v677, %v729
  %731 = vmatmul.f32.gmra.mxu0 %v627
  %v732 = vpop.f32.mrf.mxu0
  %v733 = vadd.f32 %v680, %v732
  %734 = vmatmul.f32.gmra.mxu0 %v630
  %v735 = vpop.f32.mrf.mxu0
  %v736 = vadd.f32 %v683, %v735
  %737 = vmatmul.f32.gmra.mxu0 %v633
  %v738 = vpop.f32.mrf.mxu0
  %v739 = vadd.f32 %v686, %v738
  %740 = vmatmul.f32.gmra.mxu0 %v636
  %v741 = vpop.f32.mrf.mxu0
  %v742 = vadd.f32 %v689, %v741
  %743 = vmatmul.f32.gmra.mxu0 %v639
  %v744 = vpop.f32.mrf.mxu0
  %v745 = vadd.f32 %v692, %v744
  %746 = vmatmul.f32.gmra.mxu0 %v642
  %v747 = vpop.f32.mrf.mxu0
  %v748 = vadd.f32 %v695, %v747
  %749 = vmatmul.f32.gmra.mxu0 %v645
  %v750 = vpop.f32.mrf.mxu0
  %v751 = vadd.f32 %v698, %v750
  %752 = vdwg.mxu0
  %s753 = scalar_lea.vmem %s5, 48
  %v754 = vld [vmem:[%s753] sm:$0xff]
  %v755 = vld [vmem:[%s753 + $0x8] sm:$0xff]
  %v756 = vld [vmem:[%s753 + $0x10] sm:$0x3]
  %v758 = vsel %vm357, %v612, 0
  %v761 = vsel %vm394, %v756, 0
  %763 = vmatpush.msra.mxu0 0.0
  %764 = vmatpush.msra.mxu0 0.0
  %765 = vmatpush.msra.mxu0 0.0
  %766 = vmatpush.msra.mxu0 0.0
  %767 = vmatpush.msra.mxu0 0.0
  %768 = vmatpush.msra.mxu0 0.0
  %769 = vmatpush.msra.mxu0 0.0
  %770 = vmatpush.msra.mxu0 0.0
  %771 = vmatpush.msra.mxu0 0.0
  %772 = vmatpush.msra.mxu0 0.0
  %773 = vmatpush.msra.mxu0 0.0
  %774 = vmatpush.msra.mxu0 0.0
  %775 = vmatpush.msra.mxu0 0.0
  %776 = vmatpush.msra.mxu0 %v761
  %777 = vmatpush.msra.mxu0 %v755
  %778 = vmatpush.msra.mxu0 %v754
  %779 = vmatmul.f32.gmra.mxu0 %v624
  %v780 = vpop.f32.mrf.mxu0
  %v781 = vadd.f32 0.0, %v780
  %782 = vmatmul.f32.gmra.mxu0 %v627
  %v783 = vpop.f32.mrf.mxu0
  %v784 = vadd.f32 0.0, %v783
  %785 = vmatmul.f32.gmra.mxu0 %v630
  %v786 = vpop.f32.mrf.mxu0
  %v787 = vadd.f32 0.0, %v786
  %788 = vmatmul.f32.gmra.mxu0 %v633
  %v789 = vpop.f32.mrf.mxu0
  %v790 = vadd.f32 0.0, %v789
  %791 = vmatmul.f32.gmra.mxu0 %v636
  %v792 = vpop.f32.mrf.mxu0
  %v793 = vadd.f32 0.0, %v792
  %794 = vmatmul.f32.gmra.mxu0 %v639
  %v795 = vpop.f32.mrf.mxu0
  %v796 = vadd.f32 0.0, %v795
  %797 = vmatmul.f32.gmra.mxu0 %v642
  %v798 = vpop.f32.mrf.mxu0
  %v799 = vadd.f32 0.0, %v798
  %800 = vmatmul.f32.gmra.mxu0 %v645
  %v801 = vpop.f32.mrf.mxu0
  %v802 = vadd.f32 0.0, %v801
  %803 = vmatmul.f32.gmra.mxu0 %v648
  %v804 = vpop.f32.mrf.mxu0
  %v805 = vadd.f32 0.0, %v804
  %806 = vmatmul.f32.gmra.mxu0 %v758
  %v807 = vpop.f32.mrf.mxu0
  %v808 = vadd.f32 0.0, %v807
  %809 = vdwg.mxu0
  %v810 = vadd.f32 %v724, %v781
  %v811 = vadd.f32 %v727, %v784
  %v812 = vadd.f32 %v730, %v787
  %v813 = vadd.f32 %v733, %v790
  %v814 = vadd.f32 %v736, %v793
  %v815 = vadd.f32 %v739, %v796
  %v816 = vadd.f32 %v742, %v799
  %v817 = vadd.f32 %v745, %v802
  %v818 = vadd.f32 %v748, %v805
  %v819 = vadd.f32 %v751, %v808
  %v820 = vld [vmem:[%s6] sm:$0x1]
  %v822 = vperm.slane %v820, 0
  %v824 = vadd.f32 %v810, %v822
  %v825 = vadd.f32 %v811, %v822
  %v826 = vadd.f32 %v812, %v822
  %v827 = vadd.f32 %v813, %v822
  %v828 = vadd.f32 %v814, %v822
  %v829 = vadd.f32 %v815, %v822
  %v830 = vadd.f32 %v816, %v822
  %v831 = vadd.f32 %v817, %v822
  %v832 = vadd.f32 %v818, %v822
  %v833 = vadd.f32 %v819, %v822
  %v834 = vmax.f32 %v824, 0.0
  %v835 = vmax.f32 %v825, 0.0
  %v836 = vmax.f32 %v826, 0.0
  %v837 = vmax.f32 %v827, 0.0
  %v838 = vmax.f32 %v828, 0.0
  %v839 = vmax.f32 %v829, 0.0
  %v840 = vmax.f32 %v830, 0.0
  %v841 = vmax.f32 %v831, 0.0
  %v842 = vmax.f32 %v832, 0.0
  %v843 = vmax.f32 %v833, 0.0
  %v844 = vld [vmem:[%s7] sm:$0x3]
  %s845 = scalar_lea.vmem %s7, 2
  %v846 = vld [vmem:[%s845] sm:$0x3]
  %vm847 = vcmask 15360
  %v849 = vsel %vm847, %v835, 0
  %v852 = vsel %vm394, %v846, 0
  %854 = vmatpush.msra.mxu0 0.0
  %855 = vmatpush.msra.mxu0 0.0
  %856 = vmatpush.msra.mxu0 0.0
  %857 = vmatpush.msra.mxu0 0.0
  %858 = vmatpush.msra.mxu0 0.0
  %859 = vmatpush.msra.mxu0 0.0
  %860 = vmatpush.msra.mxu0 0.0
  %861 = vmatpush.msra.mxu0 0.0
  %862 = vmatpush.msra.mxu0 0.0
  %863 = vmatpush.msra.mxu0 0.0
  %864 = vmatpush.msra.mxu0 0.0
  %865 = vmatpush.msra.mxu0 0.0
  %866 = vmatpush.msra.mxu0 0.0
  %867 = vmatpush.msra.mxu0 0.0
  %868 = vmatpush.msra.mxu0 0.0
  %869 = vmatpush.msra.mxu0 %v852
  %870 = vmatmul.f32.gmra.mxu0 %v849
  %v871 = vpop.f32.mrf.mxu0
  %v872 = vadd.f32 0.0, %v871
  %873 = vdwg.mxu0
  %v875 = vsel %vm847, %v834, 0
  %v878 = vsel %vm394, %v844, 0
  %880 = vmatpush.msra.mxu0 0.0
  %881 = vmatpush.msra.mxu0 0.0
  %882 = vmatpush.msra.mxu0 0.0
  %883 = vmatpush.msra.mxu0 0.0
  %884 = vmatpush.msra.mxu0 0.0
  %885 = vmatpush.msra.mxu0 0.0
  %886 = vmatpush.msra.mxu0 0.0
  %887 = vmatpush.msra.mxu0 0.0
  %888 = vmatpush.msra.mxu0 0.0
  %889 = vmatpush.msra.mxu0 0.0
  %890 = vmatpush.msra.mxu0 0.0
  %891 = vmatpush.msra.mxu0 0.0
  %892 = vmatpush.msra.mxu0 0.0
  %893 = vmatpush.msra.mxu0 0.0
  %894 = vmatpush.msra.mxu0 0.0
  %895 = vmatpush.msra.mxu0 %v878
  %896 = vmatmul.f32.gmra.mxu0 %v875
  %v897 = vpop.f32.mrf.mxu0
  %v898 = vadd.f32 %v872, %v897
  %899 = vdwg.mxu0
  %s900 = scalar_lea.vmem %s7, 4
  %v901 = vld [vmem:[%s900] sm:$0x3]
  %v903 = vsel %vm847, %v836, 0
  %v906 = vsel %vm394, %v901, 0
  %908 = vmatpush.msra.mxu0 0.0
  %909 = vmatpush.msra.mxu0 0.0
  %910 = vmatpush.msra.mxu0 0.0
  %911 = vmatpush.msra.mxu0 0.0
  %912 = vmatpush.msra.mxu0 0.0
  %913 = vmatpush.msra.mxu0 0.0
  %914 = vmatpush.msra.mxu0 0.0
  %915 = vmatpush.msra.mxu0 0.0
  %916 = vmatpush.msra.mxu0 0.0
  %917 = vmatpush.msra.mxu0 0.0
  %918 = vmatpush.msra.mxu0 0.0
  %919 = vmatpush.msra.mxu0 0.0
  %920 = vmatpush.msra.mxu0 0.0
  %921 = vmatpush.msra.mxu0 0.0
  %922 = vmatpush.msra.mxu0 0.0
  %923 = vmatpush.msra.mxu0 %v906
  %924 = vmatmul.f32.gmra.mxu0 %v903
  %v925 = vpop.f32.mrf.mxu0
  %v926 = vadd.f32 0.0, %v925
  %927 = vdwg.mxu0
  %v928 = vadd.f32 %v898, %v926
  %s929 = scalar_lea.vmem %s7, 6
  %v930 = vld [vmem:[%s929] sm:$0x3]
  %v932 = vsel %vm847, %v837, 0
  %v935 = vsel %vm394, %v930, 0
  %937 = vmatpush.msra.mxu0 0.0
  %938 = vmatpush.msra.mxu0 0.0
  %939 = vmatpush.msra.mxu0 0.0
  %940 = vmatpush.msra.mxu0 0.0
  %941 = vmatpush.msra.mxu0 0.0
  %942 = vmatpush.msra.mxu0 0.0
  %943 = vmatpush.msra.mxu0 0.0
  %944 = vmatpush.msra.mxu0 0.0
  %945 = vmatpush.msra.mxu0 0.0
  %946 = vmatpush.msra.mxu0 0.0
  %947 = vmatpush.msra.mxu0 0.0
  %948 = vmatpush.msra.mxu0 0.0
  %949 = vmatpush.msra.mxu0 0.0
  %950 = vmatpush.msra.mxu0 0.0
  %951 = vmatpush.msra.mxu0 0.0
  %952 = vmatpush.msra.mxu0 %v935
  %953 = vmatmul.f32.gmra.mxu0 %v932
  %v954 = vpop.f32.mrf.mxu0
  %v955 = vadd.f32 0.0, %v954
  %956 = vdwg.mxu0
  %v957 = vadd.f32 %v928, %v955
  %s958 = scalar_lea.vmem %s7, 8
  %v959 = vld [vmem:[%s958] sm:$0x3]
  %v961 = vsel %vm847, %v838, 0
  %v964 = vsel %vm394, %v959, 0
  %966 = vmatpush.msra.mxu0 0.0
  %967 = vmatpush.msra.mxu0 0.0
  %968 = vmatpush.msra.mxu0 0.0
  %969 = vmatpush.msra.mxu0 0.0
  %970 = vmatpush.msra.mxu0 0.0
  %971 = vmatpush.msra.mxu0 0.0
  %972 = vmatpush.msra.mxu0 0.0
  %973 = vmatpush.msra.mxu0 0.0
  %974 = vmatpush.msra.mxu0 0.0
  %975 = vmatpush.msra.mxu0 0.0
  %976 = vmatpush.msra.mxu0 0.0
  %977 = vmatpush.msra.mxu0 0.0
  %978 = vmatpush.msra.mxu0 0.0
  %979 = vmatpush.msra.mxu0 0.0
  %980 = vmatpush.msra.mxu0 0.0
  %981 = vmatpush.msra.mxu0 %v964
  %982 = vmatmul.f32.gmra.mxu0 %v961
  %v983 = vpop.f32.mrf.mxu0
  %v984 = vadd.f32 0.0, %v983
  %985 = vdwg.mxu0
  %v986 = vadd.f32 %v957, %v984
  %s987 = scalar_lea.vmem %s7, 10
  %v988 = vld [vmem:[%s987] sm:$0x3]
  %v990 = vsel %vm847, %v839, 0
  %v993 = vsel %vm394, %v988, 0
  %995 = vmatpush.msra.mxu0 0.0
  %996 = vmatpush.msra.mxu0 0.0
  %997 = vmatpush.msra.mxu0 0.0
  %998 = vmatpush.msra.mxu0 0.0
  %999 = vmatpush.msra.mxu0 0.0
  %1000 = vmatpush.msra.mxu0 0.0
  %1001 = vmatpush.msra.mxu0 0.0
  %1002 = vmatpush.msra.mxu0 0.0
  %1003 = vmatpush.msra.mxu0 0.0
  %1004 = vmatpush.msra.mxu0 0.0
  %1005 = vmatpush.msra.mxu0 0.0
  %1006 = vmatpush.msra.mxu0 0.0
  %1007 = vmatpush.msra.mxu0 0.0
  %1008 = vmatpush.msra.mxu0 0.0
  %1009 = vmatpush.msra.mxu0 0.0
  %1010 = vmatpush.msra.mxu0 %v993
  %1011 = vmatmul.f32.gmra.mxu0 %v990
  %v1012 = vpop.f32.mrf.mxu0
  %v1013 = vadd.f32 0.0, %v1012
  %1014 = vdwg.mxu0
  %v1015 = vadd.f32 %v986, %v1013
  %s1016 = scalar_lea.vmem %s7, 12
  %v1017 = vld [vmem:[%s1016] sm:$0x3]
  %v1019 = vsel %vm847, %v840, 0
  %v1022 = vsel %vm394, %v1017, 0
  %1024 = vmatpush.msra.mxu0 0.0
  %1025 = vmatpush.msra.mxu0 0.0
  %1026 = vmatpush.msra.mxu0 0.0
  %1027 = vmatpush.msra.mxu0 0.0
  %1028 = vmatpush.msra.mxu0 0.0
  %1029 = vmatpush.msra.mxu0 0.0
  %1030 = vmatpush.msra.mxu0 0.0
  %1031 = vmatpush.msra.mxu0 0.0
  %1032 = vmatpush.msra.mxu0 0.0
  %1033 = vmatpush.msra.mxu0 0.0
  %1034 = vmatpush.msra.mxu0 0.0
  %1035 = vmatpush.msra.mxu0 0.0
  %1036 = vmatpush.msra.mxu0 0.0
  %1037 = vmatpush.msra.mxu0 0.0
  %1038 = vmatpush.msra.mxu0 0.0
  %1039 = vmatpush.msra.mxu0 %v1022
  %1040 = vmatmul.f32.gmra.mxu0 %v1019
  %v1041 = vpop.f32.mrf.mxu0
  %v1042 = vadd.f32 0.0, %v1041
  %1043 = vdwg.mxu0
  %v1044 = vadd.f32 %v1015, %v1042
  %s1045 = scalar_lea.vmem %s7, 14
  %v1046 = vld [vmem:[%s1045] sm:$0x3]
  %v1048 = vsel %vm847, %v841, 0
  %v1051 = vsel %vm394, %v1046, 0
  %1053 = vmatpush.msra.mxu0 0.0
  %1054 = vmatpush.msra.mxu0 0.0
  %1055 = vmatpush.msra.mxu0 0.0
  %1056 = vmatpush.msra.mxu0 0.0
  %1057 = vmatpush.msra.mxu0 0.0
  %1058 = vmatpush.msra.mxu0 0.0
  %1059 = vmatpush.msra.mxu0 0.0
  %1060 = vmatpush.msra.mxu0 0.0
  %1061 = vmatpush.msra.mxu0 0.0
  %1062 = vmatpush.msra.mxu0 0.0
  %1063 = vmatpush.msra.mxu0 0.0
  %1064 = vmatpush.msra.mxu0 0.0
  %1065 = vmatpush.msra.mxu0 0.0
  %1066 = vmatpush.msra.mxu0 0.0
  %1067 = vmatpush.msra.mxu0 0.0
  %1068 = vmatpush.msra.mxu0 %v1051
  %1069 = vmatmul.f32.gmra.mxu0 %v1048
  %v1070 = vpop.f32.mrf.mxu0
  %v1071 = vadd.f32 0.0, %v1070
  %1072 = vdwg.mxu0
  %v1073 = vadd.f32 %v1044, %v1071
  %s1074 = scalar_lea.vmem %s7, 16
  %v1075 = vld [vmem:[%s1074] sm:$0x3]
  %v1077 = vsel %vm847, %v842, 0
  %v1080 = vsel %vm394, %v1075, 0
  %1082 = vmatpush.msra.mxu0 0.0
  %1083 = vmatpush.msra.mxu0 0.0
  %1084 = vmatpush.msra.mxu0 0.0
  %1085 = vmatpush.msra.mxu0 0.0
  %1086 = vmatpush.msra.mxu0 0.0
  %1087 = vmatpush.msra.mxu0 0.0
  %1088 = vmatpush.msra.mxu0 0.0
  %1089 = vmatpush.msra.mxu0 0.0
  %1090 = vmatpush.msra.mxu0 0.0
  %1091 = vmatpush.msra.mxu0 0.0
  %1092 = vmatpush.msra.mxu0 0.0
  %1093 = vmatpush.msra.mxu0 0.0
  %1094 = vmatpush.msra.mxu0 0.0
  %1095 = vmatpush.msra.mxu0 0.0
  %1096 = vmatpush.msra.mxu0 0.0
  %1097 = vmatpush.msra.mxu0 %v1080
  %1098 = vmatmul.f32.gmra.mxu0 %v1077
  %v1099 = vpop.f32.mrf.mxu0
  %v1100 = vadd.f32 0.0, %v1099
  %1101 = vdwg.mxu0
  %v1102 = vadd.f32 %v1073, %v1100
  %s1103 = scalar_lea.vmem %s7, 18
  %v1104 = vld [vmem:[%s1103] sm:$0x3]
  %v1106 = vsel %vm847, %v843, 0
  %v1109 = vsel %vm394, %v1104, 0
  %1111 = vmatpush.msra.mxu0 0.0
  %1112 = vmatpush.msra.mxu0 0.0
  %1113 = vmatpush.msra.mxu0 0.0
  %1114 = vmatpush.msra.mxu0 0.0
  %1115 = vmatpush.msra.mxu0 0.0
  %1116 = vmatpush.msra.mxu0 0.0
  %1117 = vmatpush.msra.mxu0 0.0
  %1118 = vmatpush.msra.mxu0 0.0
  %1119 = vmatpush.msra.mxu0 0.0
  %1120 = vmatpush.msra.mxu0 0.0
  %1121 = vmatpush.msra.mxu0 0.0
  %1122 = vmatpush.msra.mxu0 0.0
  %1123 = vmatpush.msra.mxu0 0.0
  %1124 = vmatpush.msra.mxu0 0.0
  %1125 = vmatpush.msra.mxu0 0.0
  %1126 = vmatpush.msra.mxu0 %v1109
  %1127 = vmatmul.f32.gmra.mxu0 %v1106
  %v1128 = vpop.f32.mrf.mxu0
  %v1129 = vadd.f32 0.0, %v1128
  %1130 = vdwg.mxu0
  %v1131 = vadd.f32 %v1102, %v1129
  %v1132 = vld [vmem:[%s8] sm:$0x1]
  %v1134 = vperm.slane %v1132, 0
  %v1136 = vadd.f32 %v1131, %v1134
  %v1137 = vmax.f32 %v1136, 0.0
  %v1138 = vld [vmem:[%s9] sm:$0xff]
  %v1139 = vld [vmem:[%s9 + $0x8] sm:$0xff]
  %v1140 = vld [vmem:[%s9 + $0x10] sm:$0xff]
  %v1141 = vld [vmem:[%s9 + $0x18] sm:$0xff]
  %v1142 = vld [vmem:[%s10] sm:$0x1]
  %v1144 = vperm.slane %v1142, 0
  %vm1146 = vcmask 261120
  %v1148 = vsel %vm1146, %v1137, 0
  %1150 = vmatpush.msra.mxu0 0.0
  %1151 = vmatpush.msra.mxu0 0.0
  %1152 = vmatpush.msra.mxu0 0.0
  %1153 = vmatpush.msra.mxu0 0.0
  %1154 = vmatpush.msra.mxu0 0.0
  %1155 = vmatpush.msra.mxu0 0.0
  %1156 = vmatpush.msra.mxu0 0.0
  %1157 = vmatpush.msra.mxu0 0.0
  %1158 = vmatpush.msra.mxu0 0.0
  %1159 = vmatpush.msra.mxu0 0.0
  %1160 = vmatpush.msra.mxu0 0.0
  %1161 = vmatpush.msra.mxu0 0.0
  %1162 = vmatpush.msra.mxu0 %v1141
  %1163 = vmatpush.msra.mxu0 %v1140
  %1164 = vmatpush.msra.mxu0 %v1139
  %1165 = vmatpush.msra.mxu0 %v1138
  %1166 = vmatmul.f32.gmra.mxu0 %v1148
  %v1167 = vpop.f32.mrf.mxu0
  %v1168 = vadd.f32 %v1144, %v1167
  %1169 = vdwg.mxu0
  %v1170 = vmax.f32 %v1168, 0.0
  %v1171 = vld [vmem:[%s11] sm:$0xff]
  %v1172 = vld [vmem:[%s11 + $0x8] sm:$0xff]
  %v1173 = vld [vmem:[%s12] sm:$0x1]
  %v1175 = vperm.slane %v1173, 0
  %vm1177 = vcmask 130048
  %v1179 = vsel %vm1177, %v1170, 0
  %1181 = vmatpush.msra.mxu0 0.0
  %1182 = vmatpush.msra.mxu0 0.0
  %1183 = vmatpush.msra.mxu0 0.0
  %1184 = vmatpush.msra.mxu0 0.0
  %1185 = vmatpush.msra.mxu0 0.0
  %1186 = vmatpush.msra.mxu0 0.0
  %1187 = vmatpush.msra.mxu0 0.0
  %1188 = vmatpush.msra.mxu0 0.0
  %1189 = vmatpush.msra.mxu0 0.0
  %1190 = vmatpush.msra.mxu0 0.0
  %1191 = vmatpush.msra.mxu0 0.0
  %1192 = vmatpush.msra.mxu0 0.0
  %1193 = vmatpush.msra.mxu0 0.0
  %1194 = vmatpush.msra.mxu0 0.0
  %1195 = vmatpush.msra.mxu0 %v1172
  %1196 = vmatpush.msra.mxu0 %v1171
  %1197 = vmatmul.f32.gmra.mxu0 %v1179
  %v1198 = vpop.f32.mrf.mxu0
  %v1199 = vadd.f32 %v1175, %v1198
  %1200 = vdwg.mxu0
  %v1201 = vmax.f32 %v1199, 0.0
  %v1202 = vld [vmem:[%s13] sm:$0xff]
  %vm1203 = vcmask 64512
  %v1205 = vsel %vm1203, %v1201, 0
  %1207 = vmatpush.msra.mxu0 0.0
  %1208 = vmatpush.msra.mxu0 0.0
  %1209 = vmatpush.msra.mxu0 0.0
  %1210 = vmatpush.msra.mxu0 0.0
  %1211 = vmatpush.msra.mxu0 0.0
  %1212 = vmatpush.msra.mxu0 0.0
  %1213 = vmatpush.msra.mxu0 0.0
  %1214 = vmatpush.msra.mxu0 0.0
  %1215 = vmatpush.msra.mxu0 0.0
  %1216 = vmatpush.msra.mxu0 0.0
  %1217 = vmatpush.msra.mxu0 0.0
  %1218 = vmatpush.msra.mxu0 0.0
  %1219 = vmatpush.msra.mxu0 0.0
  %1220 = vmatpush.msra.mxu0 0.0
  %1221 = vmatpush.msra.mxu0 0.0
  %1222 = vmatpush.msra.mxu0 %v1202
  %1223 = vmatmul.f32.gmra.mxu0 %v1205
  %v1224 = vpop.f32.mrf.mxu0
  %v1225 = vadd.f32 0.0, %v1224
  %1226 = vdwg.mxu0
  %vm1227 = vcmask 7168
  %1228 = vst.msk [vmem:[%s14] sm:$0xff] %vm1227, %v1225
  // Predicated region
  $region58: #{cnn_forward.1} parent=0 // pred_check
    _
  $region59: #{cnn_forward.1} parent=0 // pred_check_branch
    %1230 = sbr.rel (0) target = $region61
  $region60: #{cnn_forward.1} parent=0 // pred_region
    _
  $region61: #{cnn_forward.1} parent=0 // pred_fallthru
    _
  // Predicated region
  $region62: #{cnn_forward.1} parent=0 // pred_check
    _
  $region63: #{cnn_forward.1} parent=0 // pred_check_branch
    %1232 = sbr.rel (0) target = $region65
  $region64: #{cnn_forward.1} parent=0 // pred_region
    _
  $region65: #{cnn_forward.1} parent=0 // pred_fallthru
    _

</llo_original>
